<compile_context>
chip_gen: v5e
topology: v5e:2x2
jax: 0.10.0
libtpu: 0.0.40
codegen_flags: <defaults>
</compile_context>

<pallas_src>
import jax
import jax.numpy as jnp
from jax.experimental import pallas as pl
from jax.experimental.pallas import tpu as pltpu


def _round_up(x, m):
    return (x + m - 1) // m * m


def _make_noisy_kernel(dim, use_mask):
    """Kernel for one batch tile.

    refs (in order):
      enc, ent, nvm, mem : (tb, dim)  f32
      [mask]             : (tb, dim)  f32  inverted-dropout keep/scale mask
      w1x                : (4*dim, dim)    hid2state_noisy weight, pre-transposed,
                                           0.5 sentence-vec mean folded into enc/ent rows
      b1                 : (1, dim)   f32
      w2p                : (dim, n2)       state2prob_noisy weight, pre-transposed,
                                           padded to n2 = out_w - dim columns
      b2p                : (1, n2)    f32  (-1e30 in pad columns -> softmax pads == 0)
      out                : (tb, out_w) f32, lanes [0:dim]=inp, [dim:dim+noisy_count]=prob
    """

    def kernel(*refs):
        if use_mask:
            (enc_ref, ent_ref, nvm_ref, mem_ref, mask_ref,
             w1_ref, b1_ref, w2_ref, b2_ref, out_ref) = refs
        else:
            (enc_ref, ent_ref, nvm_ref, mem_ref,
             w1_ref, b1_ref, w2_ref, b2_ref, out_ref) = refs
            mask_ref = None

        enc = enc_ref[...]
        ent = ent_ref[...]
        nvm = nvm_ref[...]
        mem = mem_ref[...]

        # hid2state_noisy(cat([sentence_vec, noisy_vec_mean, memory])) as four
        # accumulating K=dim MXU dots (MXU has huge slack at these sizes).
        w1 = w1_ref[...]
        cd = w1.dtype
        h = (jnp.dot(enc.astype(cd), w1[0:dim], preferred_element_type=jnp.float32)
             + jnp.dot(ent.astype(cd), w1[dim:2 * dim], preferred_element_type=jnp.float32)
             + jnp.dot(nvm.astype(cd), w1[2 * dim:3 * dim], preferred_element_type=jnp.float32)
             + jnp.dot(mem.astype(cd), w1[3 * dim:4 * dim], preferred_element_type=jnp.float32)
             + b1_ref[...])
        h = jnp.tanh(h)                                   # f32 elementwise (v5e-safe)

        # F.dropout(..., training=True): precomputed inverted-dropout mask.
        if mask_ref is not None:
            h = h * mask_ref[...]

        # state2prob_noisy + softmax (torch softmax(dim=0) on a 1-D vector ==
        # per-row softmax here).  Pad columns carry a -1e30 bias, so their
        # exp() underflows to exactly 0 and the softmax over the real columns
        # is unchanged.
        logits = (jnp.dot(h.astype(w2_ref.dtype), w2_ref[...],
                          preferred_element_type=jnp.float32) + b2_ref[...])
        m = jnp.max(logits, axis=-1, keepdims=True)
        e = jnp.exp(logits - m)
        prob = e / jnp.sum(e, axis=-1, keepdims=True)     # (tb, n2); pads are 0

        # inp = mean(cat([sentence_vec, memory], 0), 0) on the f32 inputs (exact).
        inp = 0.25 * (enc + ent) + 0.5 * mem              # (tb, dim)

        # Single unmasked lane-dense store of the packed [inp | prob] tile.
        out_ref[...] = jnp.concatenate([inp, prob], axis=-1)

    return kernel


def prepare_noisy_params(w1, b1, w2, b2, *, compute_dtype=jnp.float32):
    """One-time parameter transform (hoisted out of the per-call path).

    w1: (dim, 3*dim)        torch nn.Linear(dim*3, dim).weight layout
    b1: (dim,)
    w2: (noisy_count, dim)  torch nn.Linear(dim, noisy_count).weight layout
    b2: (noisy_count,)

    `compute_dtype=jnp.bfloat16` makes only the MXU weight operands bf16
    (v6e/v7x); biases, activations and all elementwise math stay f32.
    """
    dim = w1.shape[0]
    noisy_count = w2.shape[0]
    out_w = _round_up(dim + noisy_count, 128)             # packed output lane width
    n2 = out_w - dim                                      # padded softmax width

    w1t = jnp.asarray(w1, jnp.float32).T                  # (3*dim, dim)
    # 0.5 * mean(enc, ent) folded into the enc/ent row blocks.
    w1x = jnp.concatenate(
        [0.5 * w1t[0:dim], 0.5 * w1t[0:dim],
         w1t[dim:2 * dim], w1t[2 * dim:3 * dim]], axis=0)  # (4*dim, dim)

    w2t = jnp.asarray(w2, jnp.float32).T                  # (dim, noisy_count)
    w2p = jnp.zeros((dim, n2), jnp.float32).at[:, :noisy_count].set(w2t)
    b2p = jnp.full((1, n2), -1e30, jnp.float32)
    b2p = b2p.at[0, :noisy_count].set(jnp.asarray(b2, jnp.float32))

    return {
        "dim": dim, "noisy_count": noisy_count, "out_w": out_w, "n2": n2,
        "w1x": w1x.astype(compute_dtype),
        "b1": jnp.asarray(b1, jnp.float32).reshape(1, dim),
        "w2p": w2p.astype(compute_dtype),
        "b2p": b2p,
    }


def dropout_mask(seed, B, dim, p):
    """Inverted-dropout keep/scale mask; generated at (B, dim) so it is
    independent of the kernel tiling (reproducible across tile-size changes)."""
    if p <= 0.0:
        return jnp.ones((B, dim), jnp.float32)
    if p >= 1.0:
        return jnp.zeros((B, dim), jnp.float32)
    keep = jax.random.bernoulli(jax.random.PRNGKey(int(seed)), 1.0 - p, (B, dim))
    return keep.astype(jnp.float32) * (1.0 / (1.0 - p))


def noisy_model_forward(params, encoder_output, entity_output, noisy_vec_mean,
                        memory, *, training=False, dropout_p=0.5, seed=0,
                        block_b=2048):
    """Batched NoisyModel.forward.

    Each of encoder_output / entity_output / noisy_vec_mean / memory may be
    (dim,), (1, dim) or (B, dim).  Returns (inp: (B, dim), prob: (B, noisy_count)).
    """
    dim = params["dim"]
    noisy_count = params["noisy_count"]
    out_w = params["out_w"]
    n2 = params["n2"]
    w1x, b1, w2p, b2p = params["w1x"], params["b1"], params["w2p"], params["b2p"]

    def as_rows(v):
        return jnp.asarray(v, jnp.float32).reshape(-1, dim)

    ins = [as_rows(v) for v in (encoder_output, entity_output,
                                noisy_vec_mean, memory)]
    B = max(a.shape[0] for a in ins)
    ins = [a if a.shape[0] == B else jnp.broadcast_to(a, (B, dim)) for a in ins]

    use_mask = bool(training) and float(dropout_p) > 0.0
    if use_mask:
        ins.append(dropout_mask(seed, B, dim, float(dropout_p)))

    # --- batch tile: VMEM-budgeted; keep >=2 tiles when there is enough work
    #     so both TensorCores are used (megacore / v7x).  Budget is kept well
    #     under the smallest default scoped-VMEM (v5e 16 MiB, v7x 32 MiB).
    n_cols_in = sum(a.shape[1] for a in ins)               # f32 lanes read per row
    per_row_bytes = 2 * 4 * (n_cols_in + out_w)            # double-buffered in + out
    budget_bytes = 12 << 20
    tb = max(8, min(int(block_b), budget_bytes // per_row_bytes))
    b_ceil = _round_up(B, 8)
    if tb >= b_ceil:
        tb = _round_up(-(-B // 2), 8) if B > 16 else b_ceil
    else:
        tb = _round_up(tb, 8)
    b_pad = _round_up(B, tb)
    if b_pad != B:
        ins = [jnp.pad(a, ((0, b_pad - B), (0, 0))) for a in ins]
    n_tiles = b_pad // tb

    row_spec = pl.BlockSpec((tb, dim), lambda i: (i, 0))
    in_specs = [row_spec] * len(ins) + [
        pl.BlockSpec((4 * dim, dim), lambda i: (0, 0)),    # w1x
        pl.BlockSpec((1, dim), lambda i: (0, 0)),          # b1
        pl.BlockSpec((dim, n2), lambda i: (0, 0)),         # w2p
        pl.BlockSpec((1, n2), lambda i: (0, 0)),           # b2p
    ]

    packed = pl.pallas_call(
        _make_noisy_kernel(dim, use_mask),
        out_shape=jax.ShapeDtypeStruct((b_pad, out_w), jnp.float32),
        grid=(n_tiles,),
        in_specs=in_specs,
        out_specs=pl.BlockSpec((tb, out_w), lambda i: (i, 0)),
        compiler_params=pltpu.CompilerParams(
            dimension_semantics=("parallel",)),            # batch axis -> 2 TCs
    )(*ins, w1x, b1, w2p, b2p)

    inp = packed[:B, 0:dim]
    prob = packed[:B, dim:dim + noisy_count]
    return inp, prob


def _reference(w1, b1, w2, b2, enc, ent, nvm, mem, mask=None):
    """Pure-JAX mirror of NoisyModel.forward, batched over rows."""
    sv = 0.5 * (enc + ent)                                 # mean of the 2-row cat
    x = jnp.concatenate([sv, nvm, mem], axis=1)            # (B, 3*dim)
    h = jnp.tanh(x @ w1.T + b1)
    if mask is not None:
        h = h * mask                                       # F.dropout with known mask
    prob = jax.nn.softmax(h @ w2.T + b2, axis=-1)
    inp = 0.5 * (sv + mem)                                 # mean(cat([sv, mem], 0), 0)
    return inp, prob


if __name__ == "__main__":
    dim, noisy_count, B = 32, 8, 300                       # B=300 exercises tiling/padding

    key = jax.random.PRNGKey(0)
    k = jax.random.split(key, 8)

    # Parameters in torch nn.Linear layout: weight (out, in), bias (out,)
    w1 = jax.random.normal(k[0], (dim, 3 * dim), jnp.float32) * 0.1
    b1 = jax.random.normal(k[1], (dim,), jnp.float32) * 0.1
    w2 = jax.random.normal(k[2], (noisy_count, dim), jnp.float32) * 0.1
    b2 = jax.random.normal(k[3], (noisy_count,), jnp.float32) * 0.1

    enc = jax.random.normal(k[4], (B, dim), jnp.float32)
    ent = jax.random.normal(k[5], (B, dim), jnp.float32)
    nvm = jax.random.normal(k[6], (B, dim), jnp.float32)
    mem = jax.random.normal(k[7], (B, dim), jnp.float32)

    inp_ref, prob_ref = _reference(w1, b1, w2, b2, enc, ent, nvm, mem)

    # --- f32 path, training=False: strict check against the reference ---
    params = prepare_noisy_params(w1, b1, w2, b2)
    inp, prob = noisy_model_forward(params, enc, ent, nvm, mem, training=False)
    jax.block_until_ready((inp, prob))
    assert inp.shape == (B, dim) and prob.shape == (B, noisy_count)
    assert jnp.allclose(inp, inp_ref, atol=1e-5, rtol=1e-5)
    assert jnp.allclose(prob, prob_ref, atol=1e-5, rtol=1e-5)
    assert jnp.allclose(jnp.sum(prob, axis=-1), 1.0, atol=1e-5)

    # --- original single-row call pattern (1-D vectors) ---
    inp1, prob1 = noisy_model_forward(params, enc[0], ent[0], nvm[0], mem[0])
    jax.block_until_ready((inp1, prob1))
    assert jnp.allclose(inp1[0], inp_ref[0], atol=1e-5, rtol=1e-5)
    assert jnp.allclose(prob1[0], prob_ref[0], atol=1e-5, rtol=1e-5)

    # --- training=True: F.dropout active; exact check with the same mask ---
    seed = 123
    mask = dropout_mask(seed, B, dim, 0.5)
    inp_t_ref, prob_t_ref = _reference(w1, b1, w2, b2, enc, ent, nvm, mem, mask=mask)
    inp_t, prob_t = noisy_model_forward(params, enc, ent, nvm, mem,
                                        training=True, dropout_p=0.5, seed=seed)
    jax.block_until_ready((inp_t, prob_t))
    assert jnp.allclose(inp_t, inp_ref, atol=1e-5, rtol=1e-5)         # inp untouched by dropout
    assert jnp.allclose(prob_t, prob_t_ref, atol=1e-5, rtol=1e-5)
    assert jnp.allclose(jnp.sum(prob_t, axis=-1), 1.0, atol=1e-4)

    # --- bf16 MXU-operand path (v6e/v7x): inp stays exact (f32), prob loose ---
    params_bf16 = prepare_noisy_params(w1, b1, w2, b2, compute_dtype=jnp.bfloat16)
    inp_b, prob_b = noisy_model_forward(params_bf16, enc, ent, nvm, mem)
    jax.block_until_ready((inp_b, prob_b))
    assert jnp.allclose(inp_b, inp_ref, atol=1e-5, rtol=1e-5)
    assert jnp.allclose(prob_b, prob_ref, atol=5e-2, rtol=5e-2)

    print("KERNEL_OK")
</pallas_src>

<mosaic_0001>
module attributes {stable_mosaic.version = 11 : i64} {
  func.func @kernel(%arg0: i32, %arg1: memref<152x32xf32, #tpu.memory_space<vmem>>, %arg2: memref<152x32xf32, #tpu.memory_space<vmem>>, %arg3: memref<152x32xf32, #tpu.memory_space<vmem>>, %arg4: memref<152x32xf32, #tpu.memory_space<vmem>>, %arg5: memref<128x32xf32, #tpu.memory_space<vmem>>, %arg6: memref<1x32xf32, #tpu.memory_space<vmem>>, %arg7: memref<32x96xf32, #tpu.memory_space<vmem>>, %arg8: memref<1x96xf32, #tpu.memory_space<vmem>>, %arg9: memref<152x128xf32, #tpu.memory_space<vmem>>) attributes {dimension_semantics = [#tpu.dimension_semantics<parallel>], iteration_bounds = array<i64: 2>, scalar_prefetch = 0 : i64, scratch_operands = 0 : i64, tpu.core_type = #tpu.core_type<tc>, window_params = [{transform_indices = @transform_0, window_bounds = array<i64: 152, 32>}, {transform_indices = @transform_1, window_bounds = array<i64: 152, 32>}, {transform_indices = @transform_2, window_bounds = array<i64: 152, 32>}, {transform_indices = @transform_3, window_bounds = array<i64: 152, 32>}, {pipeline_mode = #tpu.pipeline_mode<synchronous>, transform_indices = @transform_4, window_bounds = array<i64: 128, 32>}, {pipeline_mode = #tpu.pipeline_mode<synchronous>, transform_indices = @transform_5, window_bounds = array<i64: 1, 32>}, {pipeline_mode = #tpu.pipeline_mode<synchronous>, transform_indices = @transform_6, window_bounds = array<i64: 32, 96>}, {pipeline_mode = #tpu.pipeline_mode<synchronous>, transform_indices = @transform_7, window_bounds = array<i64: 1, 96>}, {transform_indices = @transform_8, window_bounds = array<i64: 152, 128>}]} {
    %c0 = arith.constant 0 : index
    %c0_0 = arith.constant 0 : index
    %0 = vector.load %arg1[%c0, %c0_0] : memref<152x32xf32, #tpu.memory_space<vmem>>, vector<152x32xf32>
    %c0_1 = arith.constant 0 : index
    %c0_2 = arith.constant 0 : index
    %1 = vector.load %arg2[%c0_1, %c0_2] : memref<152x32xf32, #tpu.memory_space<vmem>>, vector<152x32xf32>
    %c0_3 = arith.constant 0 : index
    %c0_4 = arith.constant 0 : index
    %2 = vector.load %arg3[%c0_3, %c0_4] : memref<152x32xf32, #tpu.memory_space<vmem>>, vector<152x32xf32>
    %c0_5 = arith.constant 0 : index
    %c0_6 = arith.constant 0 : index
    %3 = vector.load %arg4[%c0_5, %c0_6] : memref<152x32xf32, #tpu.memory_space<vmem>>, vector<152x32xf32>
    %c0_7 = arith.constant 0 : index
    %c0_8 = arith.constant 0 : index
    %4 = vector.load %arg5[%c0_7, %c0_8] : memref<128x32xf32, #tpu.memory_space<vmem>>, vector<128x32xf32>
    %5 = vector.extract_strided_slice %4 {offsets = [0, 0], sizes = [32, 32], strides = [1, 1]} : vector<128x32xf32> to vector<32x32xf32>
    %cst = arith.constant dense<0.000000e+00> : vector<152x32xf32>
    %6 = tpu.matmul %0, %5, %cst {dimension_numbers = #tpu.dot_dimension_numbers<[1], [0], [0], [1], [0, 0, 1, 1], [], []>} : vector<152x32xf32>, vector<32x32xf32>, vector<152x32xf32> -> vector<152x32xf32>
    %7 = vector.extract_strided_slice %4 {offsets = [32, 0], sizes = [32, 32], strides = [1, 1]} : vector<128x32xf32> to vector<32x32xf32>
    %cst_9 = arith.constant dense<0.000000e+00> : vector<152x32xf32>
    %8 = tpu.matmul %1, %7, %cst_9 {dimension_numbers = #tpu.dot_dimension_numbers<[1], [0], [0], [1], [0, 0, 1, 1], [], []>} : vector<152x32xf32>, vector<32x32xf32>, vector<152x32xf32> -> vector<152x32xf32>
    %9 = arith.addf %6, %8 : vector<152x32xf32>
    %10 = vector.extract_strided_slice %4 {offsets = [64, 0], sizes = [32, 32], strides = [1, 1]} : vector<128x32xf32> to vector<32x32xf32>
    %cst_10 = arith.constant dense<0.000000e+00> : vector<152x32xf32>
    %11 = tpu.matmul %2, %10, %cst_10 {dimension_numbers = #tpu.dot_dimension_numbers<[1], [0], [0], [1], [0, 0, 1, 1], [], []>} : vector<152x32xf32>, vector<32x32xf32>, vector<152x32xf32> -> vector<152x32xf32>
    %12 = arith.addf %9, %11 : vector<152x32xf32>
    %13 = vector.extract_strided_slice %4 {offsets = [96, 0], sizes = [32, 32], strides = [1, 1]} : vector<128x32xf32> to vector<32x32xf32>
    %cst_11 = arith.constant dense<0.000000e+00> : vector<152x32xf32>
    %14 = tpu.matmul %3, %13, %cst_11 {dimension_numbers = #tpu.dot_dimension_numbers<[1], [0], [0], [1], [0, 0, 1, 1], [], []>} : vector<152x32xf32>, vector<32x32xf32>, vector<152x32xf32> -> vector<152x32xf32>
    %15 = arith.addf %12, %14 : vector<152x32xf32>
    %c0_12 = arith.constant 0 : index
    %c0_13 = arith.constant 0 : index
    %16 = vector.load %arg6[%c0_12, %c0_13] : memref<1x32xf32, #tpu.memory_space<vmem>>, vector<1x32xf32>
    %17 = vector.broadcast %16 : vector<1x32xf32> to vector<152x32xf32>
    %18 = arith.addf %15, %17 : vector<152x32xf32>
    %19 = math.tanh %18 : vector<152x32xf32>
    %c0_14 = arith.constant 0 : index
    %c0_15 = arith.constant 0 : index
    %20 = vector.load %arg7[%c0_14, %c0_15] : memref<32x96xf32, #tpu.memory_space<vmem>>, vector<32x96xf32>
    %cst_16 = arith.constant dense<0.000000e+00> : vector<152x96xf32>
    %21 = tpu.matmul %19, %20, %cst_16 {dimension_numbers = #tpu.dot_dimension_numbers<[1], [0], [0], [1], [0, 0, 1, 1], [], []>} : vector<152x32xf32>, vector<32x96xf32>, vector<152x96xf32> -> vector<152x96xf32>
    %c0_17 = arith.constant 0 : index
    %c0_18 = arith.constant 0 : index
    %22 = vector.load %arg8[%c0_17, %c0_18] : memref<1x96xf32, #tpu.memory_space<vmem>>, vector<1x96xf32>
    %23 = vector.broadcast %22 : vector<1x96xf32> to vector<152x96xf32>
    %24 = arith.addf %21, %23 : vector<152x96xf32>
    %cst_19 = arith.constant dense<0xFF800000> : vector<152xf32>
    %25 = vector.multi_reduction <maximumf>, %24, %cst_19 [1] : vector<152x96xf32> to vector<152xf32>
    %26 = vector.shape_cast %25 : vector<152xf32> to vector<152x1xf32>
    %27 = vector.broadcast %26 : vector<152x1xf32> to vector<152x96xf32>
    %28 = arith.subf %24, %27 : vector<152x96xf32>
    %29 = math.exp %28 : vector<152x96xf32>
    %cst_20 = arith.constant dense<0.000000e+00> : vector<152xf32>
    %30 = vector.multi_reduction <add>, %29, %cst_20 [1] : vector<152x96xf32> to vector<152xf32>
    %31 = vector.shape_cast %30 : vector<152xf32> to vector<152x1xf32>
    %32 = vector.broadcast %31 : vector<152x1xf32> to vector<152x96xf32>
    %33 = arith.divf %29, %32 : vector<152x96xf32>
    %34 = arith.addf %0, %1 : vector<152x32xf32>
    %cst_21 = arith.constant 2.500000e-01 : f32
    %35 = vector.broadcast %cst_21 : f32 to vector<152x32xf32>
    %36 = arith.mulf %35, %34 : vector<152x32xf32>
    %cst_22 = arith.constant 5.000000e-01 : f32
    %37 = vector.broadcast %cst_22 : f32 to vector<152x32xf32>
    %38 = arith.mulf %37, %3 : vector<152x32xf32>
    %39 = arith.addf %36, %38 : vector<152x32xf32>
    %40 = tpu.concatenate %39, %33 in 1 : vector<152x32xf32>, vector<152x96xf32> -> vector<152x128xf32>
    %c0_23 = arith.constant 0 : index
    %c0_24 = arith.constant 0 : index
    %41 = vector.load %arg9[%c0_23, %c0_24] : memref<152x128xf32, #tpu.memory_space<vmem>>, vector<152x128xf32>
    tpu.vector_store %arg9[%c0_23, %c0_24], %40 {strides = array<i32>} : memref<152x128xf32, #tpu.memory_space<vmem>>, vector<152x128xf32>,
    return
  }
  func.func @transform_0(%arg0: i32) -> (i32, i32) {
    %c0_i32 = arith.constant 0 : i32
    %c0_i32_0 = arith.constant 0 : i32
    return %arg0, %c0_i32 : i32, i32
  }
  func.func @transform_1(%arg0: i32) -> (i32, i32) {
    %c0_i32 = arith.constant 0 : i32
    %c0_i32_0 = arith.constant 0 : i32
    return %arg0, %c0_i32 : i32, i32
  }
  func.func @transform_2(%arg0: i32) -> (i32, i32) {
    %c0_i32 = arith.constant 0 : i32
    %c0_i32_0 = arith.constant 0 : i32
    return %arg0, %c0_i32 : i32, i32
  }
  func.func @transform_3(%arg0: i32) -> (i32, i32) {
    %c0_i32 = arith.constant 0 : i32
    %c0_i32_0 = arith.constant 0 : i32
    return %arg0, %c0_i32 : i32, i32
  }
  func.func @transform_4(%arg0: i32) -> (i32, i32) {
    %c0_i32 = arith.constant 0 : i32
    %c0_i32_0 = arith.constant 0 : i32
    %c0_i32_1 = arith.constant 0 : i32
    return %c0_i32, %c0_i32_0 : i32, i32
  }
  func.func @transform_5(%arg0: i32) -> (i32, i32) {
    %c0_i32 = arith.constant 0 : i32
    %c0_i32_0 = arith.constant 0 : i32
    %c0_i32_1 = arith.constant 0 : i32
    return %c0_i32, %c0_i32_0 : i32, i32
  }
  func.func @transform_6(%arg0: i32) -> (i32, i32) {
    %c0_i32 = arith.constant 0 : i32
    %c0_i32_0 = arith.constant 0 : i32
    %c0_i32_1 = arith.constant 0 : i32
    return %c0_i32, %c0_i32_0 : i32, i32
  }
  func.func @transform_7(%arg0: i32) -> (i32, i32) {
    %c0_i32 = arith.constant 0 : i32
    %c0_i32_0 = arith.constant 0 : i32
    %c0_i32_1 = arith.constant 0 : i32
    return %c0_i32, %c0_i32_0 : i32, i32
  }
  func.func @transform_8(%arg0: i32) -> (i32, i32) {
    %c0_i32 = arith.constant 0 : i32
    %c0_i32_0 = arith.constant 0 : i32
    return %arg0, %c0_i32 : i32, i32
  }
}

</mosaic_0001>

<llo_original>
// kernel: tpu_custom_call.1
$region0: #{tpu_custom_call.1}
  #allocation0 [shape = 'u32[]', space=smem, size = 0x4, offset = 0x4, fixed_abs, tag = 'smem constant byte address 0x4 - core index']
  #allocation1 [shape = 'u32[72,128]{1,0:T(1,128)}', space=vmem, size = 0x9000, scoped, tag = 'internal scratch']
  %s0 = inlined_call_operand.vmem [shape: f32[304,32], index: 0, kind: input, shape index: {}]
  %s1 = inlined_call_operand.vmem [shape: f32[304,32], index: 1, kind: input, shape index: {}]
  %s2 = inlined_call_operand.vmem [shape: f32[304,32], index: 2, kind: input, shape index: {}]
  %s3 = inlined_call_operand.vmem [shape: f32[304,32], index: 3, kind: input, shape index: {}]
  %s4 = inlined_call_operand.vmem [shape: f32[128,32], index: 4, kind: input, shape index: {}]
  %s5 = inlined_call_operand.vmem [shape: f32[1,32], index: 5, kind: input, shape index: {}]
  %s6 = inlined_call_operand.vmem [shape: f32[32,96], index: 6, kind: input, shape index: {}]
  %s7 = inlined_call_operand.vmem [shape: f32[1,96], index: 7, kind: input, shape index: {}]
  %s8 = inlined_call_operand.hbm [shape: f32[304,128], index: 8, kind: output, shape index: {}]
  %s9 = sld [smem:[#allocation0]]
  $region65: #{tpu_custom_call.1} parent=0
    _
  %s11 = ssub.s32 1, %s9
  %s12 = scalar_select 0, %s11, %s9
  $region1: #{tpu_custom_call.1} parent=0
    #allocation2 [shape = 'u8[155648]{0}', space=vmem, size = 0x26000, scoped, tag = 'output window, operand 0']
    #allocation3 [shape = 's32[2]{0}', space=sflag, size = 0x8, scoped, tag = 'scoped memory for tpu_custom_call.1']
    %13 = vsyncpa [#allocation3], 0
    %s14 = scalar_lea.sflag [#allocation3], 1
    %15 = vsyncpa %s14, 0
    loop: start=0, step=1, limit=4
    $region2: #{tpu_custom_call.1} parent=1 // loop_pre_header
      _
    $region3: #{tpu_custom_call.1} parent=1 // loop_header
      %s17 = sphi 0, %s21
      %p18 = scmp.ge.s32.totalorder %s17, 4
      %s27 = sphi 0, %s29
      %s30 = sphi 0, %s27
      %s31 = sphi 0, %s30
      %s47 = sphi 0, %s31
      %s53 = sphi 0, %s55
      %s56 = sphi 0, %s53
      %s57 = sphi 0, %s56
      %s73 = sphi 0, %s57
      %s79 = sphi 0, %s81
      %s82 = sphi 0, %s79
      %s83 = sphi 0, %s82
      %s99 = sphi 0, %s83
      %s105 = sphi 0, %s107
      %s108 = sphi 0, %s105
      %s109 = sphi 0, %s108
      %s125 = sphi 0, %s109
      %s129 = sphi 0, %s129
      %s131 = sphi 0, %s129
      %s132 = sphi 0, %s131
      %s146 = sphi 0, %s132
      %s150 = sphi 0, %s150
      %s152 = sphi 0, %s150
      %s153 = sphi 0, %s152
      %s167 = sphi 0, %s153
      %s171 = sphi 0, %s171
      %s173 = sphi 0, %s171
      %s174 = sphi 0, %s173
      %s188 = sphi 0, %s174
      %s192 = sphi 0, %s192
      %s194 = sphi 0, %s192
      %s195 = sphi 0, %s194
      %s209 = sphi 0, %s195
      %s215 = sphi 0, %s217
      %s218 = sphi 0, %s215
      %s219 = sphi 0, %s218
      %s235 = sphi 0, %s219
    $region4: #{tpu_custom_call.1} parent=1 // loop_header_branch
      %20 = sbr.rel (%p18) target = $region8
    $region5: #{tpu_custom_call.1} parent=1 // loop_body
      %s22 = ssub.s32 %s17, 1
      %s23 = ssub.s32 %s17, 2
      %s24 = sadd.s32 %s17, 1
      %s25 = ssub.s32 %s17, %s24
      %p26 = scmp.eq.s32.totalorder %s25, 0
      %s28 = sadd.s32 %s27, 1
      %s29 = scalar_select %p26, %s27, %s28
      %p32 = pneg %p26
      %p33 = scmp.eq.s32.totalorder %s17, 1
      %p34 = por %p32, %p33
      %p35 = scmp.ne.s32.totalorder %s27, %s30
      %p36 = scmp.eq.s32.totalorder %s17, 0
      %p37 = por %p35, %p36
      %p38 = scmp.ne.s32.totalorder %s27, %s30
      %p39 = scmp.eq.s32.totalorder %s22, 1
      %p40 = por %p38, %p39
      %p41 = scmp.ne.s32.totalorder %s30, %s31
      %p42 = scmp.eq.s32.totalorder %s22, 0
      %p43 = por %p41, %p42
      %p44 = scmp.ne.s32.totalorder %s30, %s31
      %p45 = scmp.eq.s32.totalorder %s23, 1
      %p46 = por %p44, %p45
      %p48 = scmp.ne.s32.totalorder %s31, %s47
      %p49 = scmp.eq.s32.totalorder %s23, 0
      %p50 = por %p48, %p49
      %s51 = ssub.s32 %s17, %s24
      %p52 = scmp.eq.s32.totalorder %s51, 0
      %s54 = sadd.s32 %s53, 1
      %s55 = scalar_select %p52, %s53, %s54
      %p58 = pneg %p52
      %p59 = scmp.eq.s32.totalorder %s17, 1
      %p60 = por %p58, %p59
      %p61 = scmp.ne.s32.totalorder %s53, %s56
      %p62 = scmp.eq.s32.totalorder %s17, 0
      %p63 = por %p61, %p62
      %p64 = scmp.ne.s32.totalorder %s53, %s56
      %p65 = scmp.eq.s32.totalorder %s22, 1
      %p66 = por %p64, %p65
      %p67 = scmp.ne.s32.totalorder %s56, %s57
      %p68 = scmp.eq.s32.totalorder %s22, 0
      %p69 = por %p67, %p68
      %p70 = scmp.ne.s32.totalorder %s56, %s57
      %p71 = scmp.eq.s32.totalorder %s23, 1
      %p72 = por %p70, %p71
      %p74 = scmp.ne.s32.totalorder %s57, %s73
      %p75 = scmp.eq.s32.totalorder %s23, 0
      %p76 = por %p74, %p75
      %s77 = ssub.s32 %s17, %s24
      %p78 = scmp.eq.s32.totalorder %s77, 0
      %s80 = sadd.s32 %s79, 1
      %s81 = scalar_select %p78, %s79, %s80
      %p84 = pneg %p78
      %p85 = scmp.eq.s32.totalorder %s17, 1
      %p86 = por %p84, %p85
      %p87 = scmp.ne.s32.totalorder %s79, %s82
      %p88 = scmp.eq.s32.totalorder %s17, 0
      %p89 = por %p87, %p88
      %p90 = scmp.ne.s32.totalorder %s79, %s82
      %p91 = scmp.eq.s32.totalorder %s22, 1
      %p92 = por %p90, %p91
      %p93 = scmp.ne.s32.totalorder %s82, %s83
      %p94 = scmp.eq.s32.totalorder %s22, 0
      %p95 = por %p93, %p94
      %p96 = scmp.ne.s32.totalorder %s82, %s83
      %p97 = scmp.eq.s32.totalorder %s23, 1
      %p98 = por %p96, %p97
      %p100 = scmp.ne.s32.totalorder %s83, %s99
      %p101 = scmp.eq.s32.totalorder %s23, 0
      %p102 = por %p100, %p101
      %s103 = ssub.s32 %s17, %s24
      %p104 = scmp.eq.s32.totalorder %s103, 0
      %s106 = sadd.s32 %s105, 1
      %s107 = scalar_select %p104, %s105, %s106
      %p110 = pneg %p104
      %p111 = scmp.eq.s32.totalorder %s17, 1
      %p112 = por %p110, %p111
      %p113 = scmp.ne.s32.totalorder %s105, %s108
      %p114 = scmp.eq.s32.totalorder %s17, 0
      %p115 = por %p113, %p114
      %p116 = scmp.ne.s32.totalorder %s105, %s108
      %p117 = scmp.eq.s32.totalorder %s22, 1
      %p118 = por %p116, %p117
      %p119 = scmp.ne.s32.totalorder %s108, %s109
      %p120 = scmp.eq.s32.totalorder %s22, 0
      %p121 = por %p119, %p120
      %p122 = scmp.ne.s32.totalorder %s108, %s109
      %p123 = scmp.eq.s32.totalorder %s23, 1
      %p124 = por %p122, %p123
      %p126 = scmp.ne.s32.totalorder %s109, %s125
      %p127 = scmp.eq.s32.totalorder %s23, 0
      %p128 = por %p126, %p127
      %s130 = sadd.s32 %s129, 1
      %p133 = scmp.eq.s32.totalorder %s17, 1
      %p134 = scmp.ne.s32.totalorder %s129, %s131
      %p135 = scmp.eq.s32.totalorder %s17, 0
      %p136 = por %p134, %p135
      %p137 = scmp.ne.s32.totalorder %s129, %s131
      %p138 = scmp.eq.s32.totalorder %s22, 1
      %p139 = por %p137, %p138
      %p140 = scmp.ne.s32.totalorder %s131, %s132
      %p141 = scmp.eq.s32.totalorder %s22, 0
      %p142 = por %p140, %p141
      %p143 = scmp.ne.s32.totalorder %s131, %s132
      %p144 = scmp.eq.s32.totalorder %s23, 1
      %p145 = por %p143, %p144
      %p147 = scmp.ne.s32.totalorder %s132, %s146
      %p148 = scmp.eq.s32.totalorder %s23, 0
      %p149 = por %p147, %p148
      %s151 = sadd.s32 %s150, 1
      %p154 = scmp.eq.s32.totalorder %s17, 1
      %p155 = scmp.ne.s32.totalorder %s150, %s152
      %p156 = scmp.eq.s32.totalorder %s17, 0
      %p157 = por %p155, %p156
      %p158 = scmp.ne.s32.totalorder %s150, %s152
      %p159 = scmp.eq.s32.totalorder %s22, 1
      %p160 = por %p158, %p159
      %p161 = scmp.ne.s32.totalorder %s152, %s153
      %p162 = scmp.eq.s32.totalorder %s22, 0
      %p163 = por %p161, %p162
      %p164 = scmp.ne.s32.totalorder %s152, %s153
      %p165 = scmp.eq.s32.totalorder %s23, 1
      %p166 = por %p164, %p165
      %p168 = scmp.ne.s32.totalorder %s153, %s167
      %p169 = scmp.eq.s32.totalorder %s23, 0
      %p170 = por %p168, %p169
      %s172 = sadd.s32 %s171, 1
      %p175 = scmp.eq.s32.totalorder %s17, 1
      %p176 = scmp.ne.s32.totalorder %s171, %s173
      %p177 = scmp.eq.s32.totalorder %s17, 0
      %p178 = por %p176, %p177
      %p179 = scmp.ne.s32.totalorder %s171, %s173
      %p180 = scmp.eq.s32.totalorder %s22, 1
      %p181 = por %p179, %p180
      %p182 = scmp.ne.s32.totalorder %s173, %s174
      %p183 = scmp.eq.s32.totalorder %s22, 0
      %p184 = por %p182, %p183
      %p185 = scmp.ne.s32.totalorder %s173, %s174
      %p186 = scmp.eq.s32.totalorder %s23, 1
      %p187 = por %p185, %p186
      %p189 = scmp.ne.s32.totalorder %s174, %s188
      %p190 = scmp.eq.s32.totalorder %s23, 0
      %p191 = por %p189, %p190
      %s193 = sadd.s32 %s192, 1
      %p196 = scmp.eq.s32.totalorder %s17, 1
      %p197 = scmp.ne.s32.totalorder %s192, %s194
      %p198 = scmp.eq.s32.totalorder %s17, 0
      %p199 = por %p197, %p198
      %p200 = scmp.ne.s32.totalorder %s192, %s194
      %p201 = scmp.eq.s32.totalorder %s22, 1
      %p202 = por %p200, %p201
      %p203 = scmp.ne.s32.totalorder %s194, %s195
      %p204 = scmp.eq.s32.totalorder %s22, 0
      %p205 = por %p203, %p204
      %p206 = scmp.ne.s32.totalorder %s194, %s195
      %p207 = scmp.eq.s32.totalorder %s23, 1
      %p208 = por %p206, %p207
      %p210 = scmp.ne.s32.totalorder %s195, %s209
      %p211 = scmp.eq.s32.totalorder %s23, 0
      %p212 = por %p210, %p211
      %s213 = ssub.s32 %s17, %s24
      %p214 = scmp.eq.s32.totalorder %s213, 0
      %s216 = sadd.s32 %s215, 1
      %s217 = scalar_select %p214, %s215, %s216
      %p220 = pneg %p214
      %p221 = scmp.eq.s32.totalorder %s17, 1
      %p222 = por %p220, %p221
      %p223 = scmp.ne.s32.totalorder %s215, %s218
      %p224 = scmp.eq.s32.totalorder %s17, 0
      %p225 = por %p223, %p224
      %p226 = scmp.ne.s32.totalorder %s215, %s218
      %p227 = scmp.eq.s32.totalorder %s22, 1
      %p228 = por %p226, %p227
      %p229 = scmp.ne.s32.totalorder %s218, %s219
      %p230 = scmp.eq.s32.totalorder %s22, 0
      %p231 = por %p229, %p230
      %p232 = scmp.ne.s32.totalorder %s218, %s219
      %p233 = scmp.eq.s32.totalorder %s23, 1
      %p234 = por %p232, %p233
      %p236 = scmp.ne.s32.totalorder %s219, %s235
      %p237 = scmp.eq.s32.totalorder %s23, 0
      %p238 = por %p236, %p237
      %p239 = scmp.le.s32.totalorder 1, %s17
      %p240 = scmp.lt.s32.totalorder %s17, 3
      %p241 = pnand %p239, %p240
      %p242 = pneg %p241
      // Predicated region
      $region9: #{tpu_custom_call.1} parent=5 // pred_check
        _
      $region10: #{tpu_custom_call.1} parent=5 // pred_check_branch
        %244 = sbr.rel (%p241) target = $region12
      $region11: #{tpu_custom_call.1} parent=5 // pred_region
        %s245 = ssub.s32 %s17, 1
        // Predicated region
        $region13: #{tpu_custom_call.1} parent=11 // pred_check
          %p246 = pneg %p142
        $region14: #{tpu_custom_call.1} parent=11 // pred_check_branch
          %248 = sbr.rel (%p246) target = $region16
        $region15: #{tpu_custom_call.1} parent=11 // pred_region
          _
        $region16: #{tpu_custom_call.1} parent=11 // pred_fallthru
          _
        // Predicated region
        $region17: #{tpu_custom_call.1} parent=11 // pred_check
          %p249 = pneg %p163
        $region18: #{tpu_custom_call.1} parent=11 // pred_check_branch
          %251 = sbr.rel (%p249) target = $region20
        $region19: #{tpu_custom_call.1} parent=11 // pred_region
          _
        $region20: #{tpu_custom_call.1} parent=11 // pred_fallthru
          _
        // Predicated region
        $region21: #{tpu_custom_call.1} parent=11 // pred_check
          %p252 = pneg %p184
        $region22: #{tpu_custom_call.1} parent=11 // pred_check_branch
          %254 = sbr.rel (%p252) target = $region24
        $region23: #{tpu_custom_call.1} parent=11 // pred_region
          _
        $region24: #{tpu_custom_call.1} parent=11 // pred_fallthru
          _
        // Predicated region
        $region25: #{tpu_custom_call.1} parent=11 // pred_check
          %p255 = pneg %p205
        $region26: #{tpu_custom_call.1} parent=11 // pred_check_branch
          %257 = sbr.rel (%p255) target = $region28
        $region27: #{tpu_custom_call.1} parent=11 // pred_region
          _
        $region28: #{tpu_custom_call.1} parent=11 // pred_fallthru
          _
      $region12: #{tpu_custom_call.1} parent=5 // pred_fallthru
        _
      %p258 = scmp.lt.s32.totalorder %s17, 2
      // Predicated region
      $region29: #{tpu_custom_call.1} parent=5 // pred_check
        %p259 = pneg %p258
      $region30: #{tpu_custom_call.1} parent=5 // pred_check_branch
        %261 = sbr.rel (%p259) target = $region32
      $region31: #{tpu_custom_call.1} parent=5 // pred_region
        // Predicated region
        $region33: #{tpu_custom_call.1} parent=31 // pred_check
          %p262 = pneg %p37
        $region34: #{tpu_custom_call.1} parent=31 // pred_check_branch
          %264 = sbr.rel (%p262) target = $region36
        $region35: #{tpu_custom_call.1} parent=31 // pred_region
          %s265 = smul.u32 19, %s17
          %p266 = scmp.lt.s32.totalorder %s265, 37
          %s267 = scalar_select %p266, %s265, 37
          %s268 = smul.addr %s267, 8
          %s269 = scalar_lea.vmem %s0, %s268
          %s270 = smul.u32 19, %s17
        $region36: #{tpu_custom_call.1} parent=31 // pred_fallthru
          _
        // Predicated region
        $region37: #{tpu_custom_call.1} parent=31 // pred_check
          %p271 = pneg %p63
        $region38: #{tpu_custom_call.1} parent=31 // pred_check_branch
          %273 = sbr.rel (%p271) target = $region40
        $region39: #{tpu_custom_call.1} parent=31 // pred_region
          %s274 = smul.u32 19, %s17
          %p275 = scmp.lt.s32.totalorder %s274, 37
          %s276 = scalar_select %p275, %s274, 37
          %s277 = smul.addr %s276, 8
          %s278 = scalar_lea.vmem %s1, %s277
          %s279 = smul.u32 19, %s17
        $region40: #{tpu_custom_call.1} parent=31 // pred_fallthru
          _
        // Predicated region
        $region41: #{tpu_custom_call.1} parent=31 // pred_check
          %p280 = pneg %p89
        $region42: #{tpu_custom_call.1} parent=31 // pred_check_branch
          %282 = sbr.rel (%p280) target = $region44
        $region43: #{tpu_custom_call.1} parent=31 // pred_region
          %s283 = smul.u32 19, %s17
          %p284 = scmp.lt.s32.totalorder %s283, 37
          %s285 = scalar_select %p284, %s283, 37
          %s286 = smul.addr %s285, 8
          %s287 = scalar_lea.vmem %s2, %s286
          %s288 = smul.u32 19, %s17
        $region44: #{tpu_custom_call.1} parent=31 // pred_fallthru
          _
        // Predicated region
        $region45: #{tpu_custom_call.1} parent=31 // pred_check
          %p289 = pneg %p115
        $region46: #{tpu_custom_call.1} parent=31 // pred_check_branch
          %291 = sbr.rel (%p289) target = $region48
        $region47: #{tpu_custom_call.1} parent=31 // pred_region
          %s292 = smul.u32 19, %s17
          %p293 = scmp.lt.s32.totalorder %s292, 37
          %s294 = scalar_select %p293, %s292, 37
          %s295 = smul.addr %s294, 8
          %s296 = scalar_lea.vmem %s3, %s295
          %s297 = smul.u32 19, %s17
        $region48: #{tpu_custom_call.1} parent=31 // pred_fallthru
          _
      $region32: #{tpu_custom_call.1} parent=5 // pred_fallthru
        _
      %p298 = scmp.le.s32.totalorder 1, %s17
      %p299 = scmp.lt.s32.totalorder %s17, 3
      %p300 = pnand %p298, %p299
      %p301 = pneg %p300
      // Predicated region
      $region49: #{tpu_custom_call.1} parent=5 // pred_check
        _
      $region50: #{tpu_custom_call.1} parent=5 // pred_check_branch
        %303 = sbr.rel (%p300) target = $region52
      $region51: #{tpu_custom_call.1} parent=5 // pred_region
        %s304 = ssub.s32 %s17, 1
        %s305 = smul.u32 19, %s22
        %p306 = scmp.lt.s32.totalorder %s305, 37
        %s307 = scalar_select %p306, %s305, 37
        %s308 = smul.addr %s307, 8
        %s309 = scalar_lea.vmem %s0, %s308
        %p310 = pneg %p43
        %p311 = pneg %p40
        %s312 = smul.u32 19, %s22
        %p313 = scmp.lt.s32.totalorder %s312, 37
        %s314 = scalar_select %p313, %s312, 37
        %s315 = smul.addr %s314, 8
        %s316 = scalar_lea.vmem %s1, %s315
        %p317 = pneg %p69
        %p318 = pneg %p66
        %s319 = smul.u32 19, %s22
        %p320 = scmp.lt.s32.totalorder %s319, 37
        %s321 = scalar_select %p320, %s319, 37
        %s322 = smul.addr %s321, 8
        %s323 = scalar_lea.vmem %s2, %s322
        %p324 = pneg %p95
        %p325 = pneg %p92
        %s326 = smul.u32 19, %s22
        %p327 = scmp.lt.s32.totalorder %s326, 37
        %s328 = scalar_select %p327, %s326, 37
        %s329 = smul.addr %s328, 8
        %s330 = scalar_lea.vmem %s3, %s329
        %p331 = pneg %p121
        %p332 = pneg %p118
        %p333 = pneg %p142
        %p334 = pneg %p139
        %p335 = pneg %p163
        %p336 = pneg %p160
        %p337 = pneg %p184
        %p338 = pneg %p181
        %p339 = pneg %p205
        %p340 = pneg %p202
        %p341 = pneg %p231
        %p342 = pneg %p228
        %s343 = sand.u32 %s218, 1
        %s344 = scalar_lea.sflag [#allocation3], %s343
        %s345 = sand.u32 %s218, 1
        %s346 = smul.addr %s345, 152
        %s347 = scalar_lea.vmem [#allocation2], %s346
        %s348 = smul.u32 19, %s22
        %p349 = scmp.lt.s32.totalorder %s348, 37
        %s350 = scalar_select %p349, %s348, 37
        %s351 = smul.addr %s350, 8
        %s352 = scalar_lea.vmem %s0, %s351
        %s353 = smul.u32 19, %s22
        %s354 = smul.u32 19, %s22
        %p355 = scmp.lt.s32.totalorder %s354, 37
        %s356 = scalar_select %p355, %s354, 37
        %s357 = smul.addr %s356, 8
        %s358 = scalar_lea.vmem %s1, %s357
        %s359 = smul.u32 19, %s22
        %s360 = smul.u32 19, %s22
        %p361 = scmp.lt.s32.totalorder %s360, 37
        %s362 = scalar_select %p361, %s360, 37
        %s363 = smul.addr %s362, 8
        %s364 = scalar_lea.vmem %s2, %s363
        %s365 = smul.u32 19, %s22
        %s366 = smul.u32 19, %s22
        %p367 = scmp.lt.s32.totalorder %s366, 37
        %s368 = scalar_select %p367, %s366, 37
        %s369 = smul.addr %s368, 8
        %s370 = scalar_lea.vmem %s3, %s369
        %s371 = smul.u32 19, %s22
        %s372 = smul.u32 19, %s22
        %v373 = vld [vmem:[%s352] sm:$0xff]
        %v374 = vld [vmem:[%s352 + $0x8] sm:$0xff]
        %v375 = vld [vmem:[%s352 + $0x10] sm:$0xff]
        %v376 = vld [vmem:[%s352 + $0x18] sm:$0xff]
        %v377 = vld [vmem:[%s352 + $0x20] sm:$0xff]
        %v378 = vld [vmem:[%s352 + $0x28] sm:$0xff]
        %v379 = vld [vmem:[%s352 + $0x30] sm:$0xff]
        %v380 = vld [vmem:[%s352 + $0x38] sm:$0xff]
        %v381 = vld [vmem:[%s352 + $0x40] sm:$0xff]
        %v382 = vld [vmem:[%s352 + $0x48] sm:$0xff]
        %v383 = vld [vmem:[%s352 + $0x50] sm:$0xff]
        %v384 = vld [vmem:[%s352 + $0x58] sm:$0xff]
        %v385 = vld [vmem:[%s352 + $0x60] sm:$0xff]
        %v386 = vld [vmem:[%s352 + $0x68] sm:$0xff]
        %v387 = vld [vmem:[%s352 + $0x70] sm:$0xff]
        %v388 = vld [vmem:[%s352 + $0x78] sm:$0xff]
        %v389 = vld [vmem:[%s352 + $0x80] sm:$0xff]
        %v390 = vld [vmem:[%s352 + $0x88] sm:$0xff]
        %v391 = vld [vmem:[%s352 + $0x90] sm:$0xff]
        %v392 = vld [vmem:[%s358] sm:$0xff]
        %v393 = vld [vmem:[%s358 + $0x8] sm:$0xff]
        %v394 = vld [vmem:[%s358 + $0x10] sm:$0xff]
        %v395 = vld [vmem:[%s358 + $0x18] sm:$0xff]
        %v396 = vld [vmem:[%s358 + $0x20] sm:$0xff]
        %v397 = vld [vmem:[%s358 + $0x28] sm:$0xff]
        %v398 = vld [vmem:[%s358 + $0x30] sm:$0xff]
        %v399 = vld [vmem:[%s358 + $0x38] sm:$0xff]
        %v400 = vld [vmem:[%s358 + $0x40] sm:$0xff]
        %v401 = vld [vmem:[%s358 + $0x48] sm:$0xff]
        %v402 = vld [vmem:[%s358 + $0x50] sm:$0xff]
        %v403 = vld [vmem:[%s358 + $0x58] sm:$0xff]
        %v404 = vld [vmem:[%s358 + $0x60] sm:$0xff]
        %v405 = vld [vmem:[%s358 + $0x68] sm:$0xff]
        %v406 = vld [vmem:[%s358 + $0x70] sm:$0xff]
        %v407 = vld [vmem:[%s358 + $0x78] sm:$0xff]
        %v408 = vld [vmem:[%s358 + $0x80] sm:$0xff]
        %v409 = vld [vmem:[%s358 + $0x88] sm:$0xff]
        %v410 = vld [vmem:[%s358 + $0x90] sm:$0xff]
        %v411 = vld [vmem:[%s364] sm:$0xff]
        %v412 = vld [vmem:[%s364 + $0x8] sm:$0xff]
        %v413 = vld [vmem:[%s364 + $0x10] sm:$0xff]
        %v414 = vld [vmem:[%s364 + $0x18] sm:$0xff]
        %v415 = vld [vmem:[%s364 + $0x20] sm:$0xff]
        %v416 = vld [vmem:[%s364 + $0x28] sm:$0xff]
        %v417 = vld [vmem:[%s364 + $0x30] sm:$0xff]
        %v418 = vld [vmem:[%s364 + $0x38] sm:$0xff]
        %v419 = vld [vmem:[%s364 + $0x40] sm:$0xff]
        %v420 = vld [vmem:[%s364 + $0x48] sm:$0xff]
        %v421 = vld [vmem:[%s364 + $0x50] sm:$0xff]
        %v422 = vld [vmem:[%s364 + $0x58] sm:$0xff]
        %v423 = vld [vmem:[%s364 + $0x60] sm:$0xff]
        %v424 = vld [vmem:[%s364 + $0x68] sm:$0xff]
        %v425 = vld [vmem:[%s364 + $0x70] sm:$0xff]
        %v426 = vld [vmem:[%s364 + $0x78] sm:$0xff]
        %v427 = vld [vmem:[%s364 + $0x80] sm:$0xff]
        %v428 = vld [vmem:[%s364 + $0x88] sm:$0xff]
        %v429 = vld [vmem:[%s364 + $0x90] sm:$0xff]
        %v430 = vld [vmem:[%s370] sm:$0xff]
        %v431 = vld [vmem:[%s370 + $0x8] sm:$0xff]
        %v432 = vld [vmem:[%s370 + $0x10] sm:$0xff]
        %v433 = vld [vmem:[%s370 + $0x18] sm:$0xff]
        %v434 = vld [vmem:[%s370 + $0x20] sm:$0xff]
        %v435 = vld [vmem:[%s370 + $0x28] sm:$0xff]
        %v436 = vld [vmem:[%s370 + $0x30] sm:$0xff]
        %v437 = vld [vmem:[%s370 + $0x38] sm:$0xff]
        %v438 = vld [vmem:[%s370 + $0x40] sm:$0xff]
        %v439 = vld [vmem:[%s370 + $0x48] sm:$0xff]
        %v440 = vld [vmem:[%s370 + $0x50] sm:$0xff]
        %v441 = vld [vmem:[%s370 + $0x58] sm:$0xff]
        %v442 = vld [vmem:[%s370 + $0x60] sm:$0xff]
        %v443 = vld [vmem:[%s370 + $0x68] sm:$0xff]
        %v444 = vld [vmem:[%s370 + $0x70] sm:$0xff]
        %v445 = vld [vmem:[%s370 + $0x78] sm:$0xff]
        %v446 = vld [vmem:[%s370 + $0x80] sm:$0xff]
        %v447 = vld [vmem:[%s370 + $0x88] sm:$0xff]
        %v448 = vld [vmem:[%s370 + $0x90] sm:$0xff]
        %v449 = vld [vmem:[%s4] sm:$0xff]
        %v450 = vld [vmem:[%s4 + $0x8] sm:$0xff]
        %v451 = vld [vmem:[%s4 + $0x10] sm:$0xff]
        %v452 = vld [vmem:[%s4 + $0x18] sm:$0xff]
        %v453 = vld [vmem:[%s4 + $0x20] sm:$0xff]
        %v454 = vld [vmem:[%s4 + $0x28] sm:$0xff]
        %v455 = vld [vmem:[%s4 + $0x30] sm:$0xff]
        %v456 = vld [vmem:[%s4 + $0x38] sm:$0xff]
        %v457 = vld [vmem:[%s4 + $0x40] sm:$0xff]
        %v458 = vld [vmem:[%s4 + $0x48] sm:$0xff]
        %v459 = vld [vmem:[%s4 + $0x50] sm:$0xff]
        %v460 = vld [vmem:[%s4 + $0x58] sm:$0xff]
        %v461 = vld [vmem:[%s4 + $0x60] sm:$0xff]
        %v462 = vld [vmem:[%s4 + $0x68] sm:$0xff]
        %v463 = vld [vmem:[%s4 + $0x70] sm:$0xff]
        %v464 = vld [vmem:[%s4 + $0x78] sm:$0xff]
        %vm465 = vcmask 261120
        %v467 = vsel %vm465, %v392, 0
        %v470 = vsel %vm465, %v393, 0
        %v473 = vsel %vm465, %v394, 0
        %v476 = vsel %vm465, %v395, 0
        %v479 = vsel %vm465, %v396, 0
        %v482 = vsel %vm465, %v397, 0
        %v485 = vsel %vm465, %v398, 0
        %v488 = vsel %vm465, %v399, 0
        %v491 = vsel %vm465, %v400, 0
        %v494 = vsel %vm465, %v401, 0
        %v497 = vsel %vm465, %v402, 0
        %v500 = vsel %vm465, %v403, 0
        %v503 = vsel %vm465, %v404, 0
        %v506 = vsel %vm465, %v405, 0
        %v509 = vsel %vm465, %v406, 0
        %v512 = vsel %vm465, %v407, 0
        %v515 = vsel %vm465, %v408, 0
        %v518 = vsel %vm465, %v409, 0
        %v521 = vsel %vm465, %v410, 0
        %523 = vmatpush.msra.mxu0 0.0
        %524 = vmatpush.msra.mxu0 0.0
        %525 = vmatpush.msra.mxu0 0.0
        %526 = vmatpush.msra.mxu0 0.0
        %527 = vmatpush.msra.mxu0 0.0
        %528 = vmatpush.msra.mxu0 0.0
        %529 = vmatpush.msra.mxu0 0.0
        %530 = vmatpush.msra.mxu0 0.0
        %531 = vmatpush.msra.mxu0 0.0
        %532 = vmatpush.msra.mxu0 0.0
        %533 = vmatpush.msra.mxu0 0.0
        %534 = vmatpush.msra.mxu0 0.0
        %535 = vmatpush.msra.mxu0 %v456
        %536 = vmatpush.msra.mxu0 %v455
        %537 = vmatpush.msra.mxu0 %v454
        %538 = vmatpush.msra.mxu0 %v453
        %539 = vmatmul.f32.gmra.mxu0 %v467
        %v540 = vpop.f32.mrf.mxu0
        %v541 = vadd.f32 0.0, %v540
        %542 = vmatmul.f32.gmra.mxu0 %v470
        %v543 = vpop.f32.mrf.mxu0
        %v544 = vadd.f32 0.0, %v543
        %545 = vmatmul.f32.gmra.mxu0 %v473
        %v546 = vpop.f32.mrf.mxu0
        %v547 = vadd.f32 0.0, %v546
        %548 = vmatmul.f32.gmra.mxu0 %v476
        %v549 = vpop.f32.mrf.mxu0
        %v550 = vadd.f32 0.0, %v549
        %551 = vmatmul.f32.gmra.mxu0 %v479
        %v552 = vpop.f32.mrf.mxu0
        %v553 = vadd.f32 0.0, %v552
        %554 = vmatmul.f32.gmra.mxu0 %v482
        %v555 = vpop.f32.mrf.mxu0
        %v556 = vadd.f32 0.0, %v555
        %557 = vmatmul.f32.gmra.mxu0 %v485
        %v558 = vpop.f32.mrf.mxu0
        %v559 = vadd.f32 0.0, %v558
        %560 = vmatmul.f32.gmra.mxu0 %v488
        %v561 = vpop.f32.mrf.mxu0
        %v562 = vadd.f32 0.0, %v561
        %563 = vmatmul.f32.gmra.mxu0 %v491
        %v564 = vpop.f32.mrf.mxu0
        %v565 = vadd.f32 0.0, %v564
        %566 = vmatmul.f32.gmra.mxu0 %v494
        %v567 = vpop.f32.mrf.mxu0
        %v568 = vadd.f32 0.0, %v567
        %569 = vmatmul.f32.gmra.mxu0 %v497
        %v570 = vpop.f32.mrf.mxu0
        %v571 = vadd.f32 0.0, %v570
        %572 = vmatmul.f32.gmra.mxu0 %v500
        %v573 = vpop.f32.mrf.mxu0
        %v574 = vadd.f32 0.0, %v573
        %575 = vmatmul.f32.gmra.mxu0 %v503
        %v576 = vpop.f32.mrf.mxu0
        %v577 = vadd.f32 0.0, %v576
        %578 = vmatmul.f32.gmra.mxu0 %v506
        %v579 = vpop.f32.mrf.mxu0
        %v580 = vadd.f32 0.0, %v579
        %581 = vmatmul.f32.gmra.mxu0 %v509
        %v582 = vpop.f32.mrf.mxu0
        %v583 = vadd.f32 0.0, %v582
        %584 = vmatmul.f32.gmra.mxu0 %v512
        %v585 = vpop.f32.mrf.mxu0
        %v586 = vadd.f32 0.0, %v585
        %587 = vmatmul.f32.gmra.mxu0 %v515
        %v588 = vpop.f32.mrf.mxu0
        %v589 = vadd.f32 0.0, %v588
        %590 = vmatmul.f32.gmra.mxu0 %v518
        %v591 = vpop.f32.mrf.mxu0
        %v592 = vadd.f32 0.0, %v591
        %593 = vmatmul.f32.gmra.mxu0 %v521
        %v594 = vpop.f32.mrf.mxu0
        %v595 = vadd.f32 0.0, %v594
        %596 = vdwg.mxu0
        %v598 = vsel %vm465, %v373, 0
        %v601 = vsel %vm465, %v374, 0
        %v604 = vsel %vm465, %v375, 0
        %v607 = vsel %vm465, %v376, 0
        %v610 = vsel %vm465, %v377, 0
        %v613 = vsel %vm465, %v378, 0
        %v616 = vsel %vm465, %v379, 0
        %v619 = vsel %vm465, %v380, 0
        %v622 = vsel %vm465, %v381, 0
        %v625 = vsel %vm465, %v382, 0
        %v628 = vsel %vm465, %v383, 0
        %v631 = vsel %vm465, %v384, 0
        %v634 = vsel %vm465, %v385, 0
        %v637 = vsel %vm465, %v386, 0
        %v640 = vsel %vm465, %v387, 0
        %v643 = vsel %vm465, %v388, 0
        %v646 = vsel %vm465, %v389, 0
        %v649 = vsel %vm465, %v390, 0
        %v652 = vsel %vm465, %v391, 0
        %654 = vmatpush.msra.mxu0 0.0
        %655 = vmatpush.msra.mxu0 0.0
        %656 = vmatpush.msra.mxu0 0.0
        %657 = vmatpush.msra.mxu0 0.0
        %658 = vmatpush.msra.mxu0 0.0
        %659 = vmatpush.msra.mxu0 0.0
        %660 = vmatpush.msra.mxu0 0.0
        %661 = vmatpush.msra.mxu0 0.0
        %662 = vmatpush.msra.mxu0 0.0
        %663 = vmatpush.msra.mxu0 0.0
        %664 = vmatpush.msra.mxu0 0.0
        %665 = vmatpush.msra.mxu0 0.0
        %666 = vmatpush.msra.mxu0 %v452
        %667 = vmatpush.msra.mxu0 %v451
        %668 = vmatpush.msra.mxu0 %v450
        %669 = vmatpush.msra.mxu0 %v449
        %670 = vmatmul.f32.gmra.mxu0 %v598
        %v671 = vpop.f32.mrf.mxu0
        %v672 = vadd.f32 %v541, %v671
        %673 = vmatmul.f32.gmra.mxu0 %v601
        %v674 = vpop.f32.mrf.mxu0
        %v675 = vadd.f32 %v544, %v674
        %676 = vmatmul.f32.gmra.mxu0 %v604
        %v677 = vpop.f32.mrf.mxu0
        %v678 = vadd.f32 %v547, %v677
        %679 = vmatmul.f32.gmra.mxu0 %v607
        %v680 = vpop.f32.mrf.mxu0
        %v681 = vadd.f32 %v550, %v680
        %682 = vmatmul.f32.gmra.mxu0 %v610
        %v683 = vpop.f32.mrf.mxu0
        %v684 = vadd.f32 %v553, %v683
        %685 = vmatmul.f32.gmra.mxu0 %v613
        %v686 = vpop.f32.mrf.mxu0
        %v687 = vadd.f32 %v556, %v686
        %688 = vmatmul.f32.gmra.mxu0 %v616
        %v689 = vpop.f32.mrf.mxu0
        %v690 = vadd.f32 %v559, %v689
        %691 = vmatmul.f32.gmra.mxu0 %v619
        %v692 = vpop.f32.mrf.mxu0
        %v693 = vadd.f32 %v562, %v692
        %694 = vmatmul.f32.gmra.mxu0 %v622
        %v695 = vpop.f32.mrf.mxu0
        %v696 = vadd.f32 %v565, %v695
        %697 = vmatmul.f32.gmra.mxu0 %v625
        %v698 = vpop.f32.mrf.mxu0
        %v699 = vadd.f32 %v568, %v698
        %700 = vmatmul.f32.gmra.mxu0 %v628
        %v701 = vpop.f32.mrf.mxu0
        %v702 = vadd.f32 %v571, %v701
        %703 = vmatmul.f32.gmra.mxu0 %v631
        %v704 = vpop.f32.mrf.mxu0
        %v705 = vadd.f32 %v574, %v704
        %706 = vmatmul.f32.gmra.mxu0 %v634
        %v707 = vpop.f32.mrf.mxu0
        %v708 = vadd.f32 %v577, %v707
        %709 = vmatmul.f32.gmra.mxu0 %v637
        %v710 = vpop.f32.mrf.mxu0
        %v711 = vadd.f32 %v580, %v710
        %712 = vmatmul.f32.gmra.mxu0 %v640
        %v713 = vpop.f32.mrf.mxu0
        %v714 = vadd.f32 %v583, %v713
        %715 = vmatmul.f32.gmra.mxu0 %v643
        %v716 = vpop.f32.mrf.mxu0
        %v717 = vadd.f32 %v586, %v716
        %718 = vmatmul.f32.gmra.mxu0 %v646
        %v719 = vpop.f32.mrf.mxu0
        %v720 = vadd.f32 %v589, %v719
        %721 = vmatmul.f32.gmra.mxu0 %v649
        %v722 = vpop.f32.mrf.mxu0
        %v723 = vadd.f32 %v592, %v722
        %724 = vmatmul.f32.gmra.mxu0 %v652
        %v725 = vpop.f32.mrf.mxu0
        %v726 = vadd.f32 %v595, %v725
        %727 = vdwg.mxu0
        %v729 = vsel %vm465, %v411, 0
        %v732 = vsel %vm465, %v412, 0
        %v735 = vsel %vm465, %v413, 0
        %v738 = vsel %vm465, %v414, 0
        %v741 = vsel %vm465, %v415, 0
        %v744 = vsel %vm465, %v416, 0
        %v747 = vsel %vm465, %v417, 0
        %v750 = vsel %vm465, %v418, 0
        %v753 = vsel %vm465, %v419, 0
        %v756 = vsel %vm465, %v420, 0
        %v759 = vsel %vm465, %v421, 0
        %v762 = vsel %vm465, %v422, 0
        %v765 = vsel %vm465, %v423, 0
        %v768 = vsel %vm465, %v424, 0
        %v771 = vsel %vm465, %v425, 0
        %v774 = vsel %vm465, %v426, 0
        %v777 = vsel %vm465, %v427, 0
        %v780 = vsel %vm465, %v428, 0
        %v783 = vsel %vm465, %v429, 0
        %785 = vmatpush.msra.mxu0 0.0
        %786 = vmatpush.msra.mxu0 0.0
        %787 = vmatpush.msra.mxu0 0.0
        %788 = vmatpush.msra.mxu0 0.0
        %789 = vmatpush.msra.mxu0 0.0
        %790 = vmatpush.msra.mxu0 0.0
        %791 = vmatpush.msra.mxu0 0.0
        %792 = vmatpush.msra.mxu0 0.0
        %793 = vmatpush.msra.mxu0 0.0
        %794 = vmatpush.msra.mxu0 0.0
        %795 = vmatpush.msra.mxu0 0.0
        %796 = vmatpush.msra.mxu0 0.0
        %797 = vmatpush.msra.mxu0 %v460
        %798 = vmatpush.msra.mxu0 %v459
        %799 = vmatpush.msra.mxu0 %v458
        %800 = vmatpush.msra.mxu0 %v457
        %801 = vmatmul.f32.gmra.mxu0 %v729
        %v802 = vpop.f32.mrf.mxu0
        %v803 = vadd.f32 0.0, %v802
        %804 = vmatmul.f32.gmra.mxu0 %v732
        %v805 = vpop.f32.mrf.mxu0
        %v806 = vadd.f32 0.0, %v805
        %807 = vmatmul.f32.gmra.mxu0 %v735
        %v808 = vpop.f32.mrf.mxu0
        %v809 = vadd.f32 0.0, %v808
        %810 = vmatmul.f32.gmra.mxu0 %v738
        %v811 = vpop.f32.mrf.mxu0
        %v812 = vadd.f32 0.0, %v811
        %813 = vmatmul.f32.gmra.mxu0 %v741
        %v814 = vpop.f32.mrf.mxu0
        %v815 = vadd.f32 0.0, %v814
        %816 = vmatmul.f32.gmra.mxu0 %v744
        %v817 = vpop.f32.mrf.mxu0
        %v818 = vadd.f32 0.0, %v817
        %819 = vmatmul.f32.gmra.mxu0 %v747
        %v820 = vpop.f32.mrf.mxu0
        %v821 = vadd.f32 0.0, %v820
        %822 = vmatmul.f32.gmra.mxu0 %v750
        %v823 = vpop.f32.mrf.mxu0
        %v824 = vadd.f32 0.0, %v823
        %825 = vmatmul.f32.gmra.mxu0 %v753
        %v826 = vpop.f32.mrf.mxu0
        %v827 = vadd.f32 0.0, %v826
        %828 = vmatmul.f32.gmra.mxu0 %v756
        %v829 = vpop.f32.mrf.mxu0
        %v830 = vadd.f32 0.0, %v829
        %831 = vmatmul.f32.gmra.mxu0 %v759
        %v832 = vpop.f32.mrf.mxu0
        %v833 = vadd.f32 0.0, %v832
        %834 = vmatmul.f32.gmra.mxu0 %v762
        %v835 = vpop.f32.mrf.mxu0
        %v836 = vadd.f32 0.0, %v835
        %837 = vmatmul.f32.gmra.mxu0 %v765
        %v838 = vpop.f32.mrf.mxu0
        %v839 = vadd.f32 0.0, %v838
        %840 = vmatmul.f32.gmra.mxu0 %v768
        %v841 = vpop.f32.mrf.mxu0
        %v842 = vadd.f32 0.0, %v841
        %843 = vmatmul.f32.gmra.mxu0 %v771
        %v844 = vpop.f32.mrf.mxu0
        %v845 = vadd.f32 0.0, %v844
        %846 = vmatmul.f32.gmra.mxu0 %v774
        %v847 = vpop.f32.mrf.mxu0
        %v848 = vadd.f32 0.0, %v847
        %849 = vmatmul.f32.gmra.mxu0 %v777
        %v850 = vpop.f32.mrf.mxu0
        %v851 = vadd.f32 0.0, %v850
        %852 = vmatmul.f32.gmra.mxu0 %v780
        %v853 = vpop.f32.mrf.mxu0
        %v854 = vadd.f32 0.0, %v853
        %855 = vmatmul.f32.gmra.mxu0 %v783
        %v856 = vpop.f32.mrf.mxu0
        %v857 = vadd.f32 0.0, %v856
        %858 = vdwg.mxu0
        %v859 = vadd.f32 %v672, %v803
        %v860 = vadd.f32 %v675, %v806
        %v861 = vadd.f32 %v678, %v809
        %v862 = vadd.f32 %v681, %v812
        %v863 = vadd.f32 %v684, %v815
        %v864 = vadd.f32 %v687, %v818
        %v865 = vadd.f32 %v690, %v821
        %v866 = vadd.f32 %v693, %v824
        %v867 = vadd.f32 %v696, %v827
        %v868 = vadd.f32 %v699, %v830
        %v869 = vadd.f32 %v702, %v833
        %v870 = vadd.f32 %v705, %v836
        %v871 = vadd.f32 %v708, %v839
        %v872 = vadd.f32 %v711, %v842
        %v873 = vadd.f32 %v714, %v845
        %v874 = vadd.f32 %v717, %v848
        %v875 = vadd.f32 %v720, %v851
        %v876 = vadd.f32 %v723, %v854
        %v877 = vadd.f32 %v726, %v857
        %v879 = vsel %vm465, %v430, 0
        %v882 = vsel %vm465, %v431, 0
        %v885 = vsel %vm465, %v432, 0
        %v888 = vsel %vm465, %v433, 0
        %v891 = vsel %vm465, %v434, 0
        %v894 = vsel %vm465, %v435, 0
        %v897 = vsel %vm465, %v436, 0
        %v900 = vsel %vm465, %v437, 0
        %v903 = vsel %vm465, %v438, 0
        %v906 = vsel %vm465, %v439, 0
        %v909 = vsel %vm465, %v440, 0
        %v912 = vsel %vm465, %v441, 0
        %v915 = vsel %vm465, %v442, 0
        %v918 = vsel %vm465, %v443, 0
        %v921 = vsel %vm465, %v444, 0
        %v924 = vsel %vm465, %v445, 0
        %v927 = vsel %vm465, %v446, 0
        %v930 = vsel %vm465, %v447, 0
        %v933 = vsel %vm465, %v448, 0
        %935 = vmatpush.msra.mxu0 0.0
        %936 = vmatpush.msra.mxu0 0.0
        %937 = vmatpush.msra.mxu0 0.0
        %938 = vmatpush.msra.mxu0 0.0
        %939 = vmatpush.msra.mxu0 0.0
        %940 = vmatpush.msra.mxu0 0.0
        %941 = vmatpush.msra.mxu0 0.0
        %942 = vmatpush.msra.mxu0 0.0
        %943 = vmatpush.msra.mxu0 0.0
        %944 = vmatpush.msra.mxu0 0.0
        %945 = vmatpush.msra.mxu0 0.0
        %946 = vmatpush.msra.mxu0 0.0
        %947 = vmatpush.msra.mxu0 %v464
        %948 = vmatpush.msra.mxu0 %v463
        %949 = vmatpush.msra.mxu0 %v462
        %950 = vmatpush.msra.mxu0 %v461
        %951 = vmatmul.f32.gmra.mxu0 %v879
        %v952 = vpop.f32.mrf.mxu0
        %v953 = vadd.f32 0.0, %v952
        %954 = vmatmul.f32.gmra.mxu0 %v882
        %v955 = vpop.f32.mrf.mxu0
        %v956 = vadd.f32 0.0, %v955
        %957 = vmatmul.f32.gmra.mxu0 %v885
        %v958 = vpop.f32.mrf.mxu0
        %v959 = vadd.f32 0.0, %v958
        %960 = vmatmul.f32.gmra.mxu0 %v888
        %v961 = vpop.f32.mrf.mxu0
        %v962 = vadd.f32 0.0, %v961
        %963 = vmatmul.f32.gmra.mxu0 %v891
        %v964 = vpop.f32.mrf.mxu0
        %v965 = vadd.f32 0.0, %v964
        %966 = vmatmul.f32.gmra.mxu0 %v894
        %v967 = vpop.f32.mrf.mxu0
        %v968 = vadd.f32 0.0, %v967
        %969 = vmatmul.f32.gmra.mxu0 %v897
        %v970 = vpop.f32.mrf.mxu0
        %v971 = vadd.f32 0.0, %v970
        %972 = vmatmul.f32.gmra.mxu0 %v900
        %v973 = vpop.f32.mrf.mxu0
        %v974 = vadd.f32 0.0, %v973
        %975 = vmatmul.f32.gmra.mxu0 %v903
        %v976 = vpop.f32.mrf.mxu0
        %v977 = vadd.f32 0.0, %v976
        %978 = vmatmul.f32.gmra.mxu0 %v906
        %v979 = vpop.f32.mrf.mxu0
        %v980 = vadd.f32 0.0, %v979
        %981 = vmatmul.f32.gmra.mxu0 %v909
        %v982 = vpop.f32.mrf.mxu0
        %v983 = vadd.f32 0.0, %v982
        %984 = vmatmul.f32.gmra.mxu0 %v912
        %v985 = vpop.f32.mrf.mxu0
        %v986 = vadd.f32 0.0, %v985
        %987 = vmatmul.f32.gmra.mxu0 %v915
        %v988 = vpop.f32.mrf.mxu0
        %v989 = vadd.f32 0.0, %v988
        %990 = vmatmul.f32.gmra.mxu0 %v918
        %v991 = vpop.f32.mrf.mxu0
        %v992 = vadd.f32 0.0, %v991
        %993 = vmatmul.f32.gmra.mxu0 %v921
        %v994 = vpop.f32.mrf.mxu0
        %v995 = vadd.f32 0.0, %v994
        %996 = vmatmul.f32.gmra.mxu0 %v924
        %v997 = vpop.f32.mrf.mxu0
        %v998 = vadd.f32 0.0, %v997
        %999 = vmatmul.f32.gmra.mxu0 %v927
        %v1000 = vpop.f32.mrf.mxu0
        %v1001 = vadd.f32 0.0, %v1000
        %1002 = vmatmul.f32.gmra.mxu0 %v930
        %v1003 = vpop.f32.mrf.mxu0
        %v1004 = vadd.f32 0.0, %v1003
        %1005 = vmatmul.f32.gmra.mxu0 %v933
        %v1006 = vpop.f32.mrf.mxu0
        %v1007 = vadd.f32 0.0, %v1006
        %1008 = vdwg.mxu0
        %v1009 = vadd.f32 %v859, %v953
        %v1010 = vadd.f32 %v860, %v956
        %v1011 = vadd.f32 %v861, %v959
        %v1012 = vadd.f32 %v862, %v962
        %v1013 = vadd.f32 %v863, %v965
        %v1014 = vadd.f32 %v864, %v968
        %v1015 = vadd.f32 %v865, %v971
        %v1016 = vadd.f32 %v866, %v974
        %v1017 = vadd.f32 %v867, %v977
        %v1018 = vadd.f32 %v868, %v980
        %v1019 = vadd.f32 %v869, %v983
        %v1020 = vadd.f32 %v870, %v986
        %v1021 = vadd.f32 %v871, %v989
        %v1022 = vadd.f32 %v872, %v992
        %v1023 = vadd.f32 %v873, %v995
        %v1024 = vadd.f32 %v874, %v998
        %v1025 = vadd.f32 %v875, %v1001
        %v1026 = vadd.f32 %v876, %v1004
        %v1027 = vadd.f32 %v877, %v1007
        %v1028 = vld [vmem:[%s5] sm:$0x1]
        %v1030 = vperm.slane %v1028, 0
        %v1032 = vadd.f32 %v1009, %v1030
        %v1033 = vadd.f32 %v1010, %v1030
        %v1034 = vadd.f32 %v1011, %v1030
        %v1035 = vadd.f32 %v1012, %v1030
        %v1036 = vadd.f32 %v1013, %v1030
        %v1037 = vadd.f32 %v1014, %v1030
        %v1038 = vadd.f32 %v1015, %v1030
        %v1039 = vadd.f32 %v1016, %v1030
        %v1040 = vadd.f32 %v1017, %v1030
        %v1041 = vadd.f32 %v1018, %v1030
        %v1042 = vadd.f32 %v1019, %v1030
        %v1043 = vadd.f32 %v1020, %v1030
        %v1044 = vadd.f32 %v1021, %v1030
        %v1045 = vadd.f32 %v1022, %v1030
        %v1046 = vadd.f32 %v1023, %v1030
        %v1047 = vadd.f32 %v1024, %v1030
        %v1048 = vadd.f32 %v1025, %v1030
        %v1049 = vadd.f32 %v1026, %v1030
        %v1050 = vadd.f32 %v1027, %v1030
        %v1051 = vtanh.pop %v1032
        %v1052 = vtanh.pop %v1033
        %v1053 = vtanh.pop %v1034
        %v1054 = vtanh.pop %v1035
        %v1055 = vtanh.pop %v1036
        %v1056 = vtanh.pop %v1037
        %v1057 = vtanh.pop %v1038
        %v1058 = vtanh.pop %v1039
        %v1059 = vtanh.pop %v1040
        %v1060 = vtanh.pop %v1041
        %v1061 = vtanh.pop %v1042
        %v1062 = vtanh.pop %v1043
        %v1063 = vtanh.pop %v1044
        %v1064 = vtanh.pop %v1045
        %v1065 = vtanh.pop %v1046
        %v1066 = vtanh.pop %v1047
        %v1067 = vtanh.pop %v1048
        %v1068 = vtanh.pop %v1049
        %v1069 = vtanh.pop %v1050
        %v1070 = vld [vmem:[%s6] sm:$0xff]
        %v1071 = vld [vmem:[%s6 + $0x8] sm:$0xff]
        %v1072 = vld [vmem:[%s6 + $0x10] sm:$0xff]
        %v1073 = vld [vmem:[%s6 + $0x18] sm:$0xff]
        %v1074 = vld [vmem:[%s7] sm:$0x1]
        %v1076 = vperm.slane %v1074, 0
        %v1079 = vsel %vm465, %v1051, 0
        %v1082 = vsel %vm465, %v1052, 0
        %v1085 = vsel %vm465, %v1053, 0
        %v1088 = vsel %vm465, %v1054, 0
        %v1091 = vsel %vm465, %v1055, 0
        %v1094 = vsel %vm465, %v1056, 0
        %v1097 = vsel %vm465, %v1057, 0
        %v1100 = vsel %vm465, %v1058, 0
        %v1103 = vsel %vm465, %v1059, 0
        %v1106 = vsel %vm465, %v1060, 0
        %v1109 = vsel %vm465, %v1061, 0
        %v1112 = vsel %vm465, %v1062, 0
        %v1115 = vsel %vm465, %v1063, 0
        %v1118 = vsel %vm465, %v1064, 0
        %v1121 = vsel %vm465, %v1065, 0
        %v1124 = vsel %vm465, %v1066, 0
        %v1127 = vsel %vm465, %v1067, 0
        %v1130 = vsel %vm465, %v1068, 0
        %v1133 = vsel %vm465, %v1069, 0
        %1135 = vmatpush.msra.mxu0 0.0
        %1136 = vmatpush.msra.mxu0 0.0
        %1137 = vmatpush.msra.mxu0 0.0
        %1138 = vmatpush.msra.mxu0 0.0
        %1139 = vmatpush.msra.mxu0 0.0
        %1140 = vmatpush.msra.mxu0 0.0
        %1141 = vmatpush.msra.mxu0 0.0
        %1142 = vmatpush.msra.mxu0 0.0
        %1143 = vmatpush.msra.mxu0 0.0
        %1144 = vmatpush.msra.mxu0 0.0
        %1145 = vmatpush.msra.mxu0 0.0
        %1146 = vmatpush.msra.mxu0 0.0
        %1147 = vmatpush.msra.mxu0 %v1073
        %1148 = vmatpush.msra.mxu0 %v1072
        %1149 = vmatpush.msra.mxu0 %v1071
        %1150 = vmatpush.msra.mxu0 %v1070
        %1151 = vmatmul.f32.gmra.mxu0 %v1079
        %v1152 = vpop.f32.mrf.mxu0
        %v1153 = vadd.f32 %v1076, %v1152
        %1154 = vmatmul.f32.gmra.mxu0 %v1082
        %v1155 = vpop.f32.mrf.mxu0
        %v1156 = vadd.f32 %v1076, %v1155
        %1157 = vmatmul.f32.gmra.mxu0 %v1085
        %v1158 = vpop.f32.mrf.mxu0
        %v1159 = vadd.f32 %v1076, %v1158
        %1160 = vmatmul.f32.gmra.mxu0 %v1088
        %v1161 = vpop.f32.mrf.mxu0
        %v1162 = vadd.f32 %v1076, %v1161
        %1163 = vmatmul.f32.gmra.mxu0 %v1091
        %v1164 = vpop.f32.mrf.mxu0
        %v1165 = vadd.f32 %v1076, %v1164
        %1166 = vmatmul.f32.gmra.mxu0 %v1094
        %v1167 = vpop.f32.mrf.mxu0
        %v1168 = vadd.f32 %v1076, %v1167
        %1169 = vmatmul.f32.gmra.mxu0 %v1097
        %v1170 = vpop.f32.mrf.mxu0
        %v1171 = vadd.f32 %v1076, %v1170
        %1172 = vmatmul.f32.gmra.mxu0 %v1100
        %v1173 = vpop.f32.mrf.mxu0
        %v1174 = vadd.f32 %v1076, %v1173
        %1175 = vmatmul.f32.gmra.mxu0 %v1103
        %v1176 = vpop.f32.mrf.mxu0
        %v1177 = vadd.f32 %v1076, %v1176
        %1178 = vmatmul.f32.gmra.mxu0 %v1106
        %v1179 = vpop.f32.mrf.mxu0
        %v1180 = vadd.f32 %v1076, %v1179
        %1181 = vmatmul.f32.gmra.mxu0 %v1109
        %v1182 = vpop.f32.mrf.mxu0
        %v1183 = vadd.f32 %v1076, %v1182
        %1184 = vmatmul.f32.gmra.mxu0 %v1112
        %v1185 = vpop.f32.mrf.mxu0
        %v1186 = vadd.f32 %v1076, %v1185
        %1187 = vmatmul.f32.gmra.mxu0 %v1115
        %v1188 = vpop.f32.mrf.mxu0
        %v1189 = vadd.f32 %v1076, %v1188
        %1190 = vmatmul.f32.gmra.mxu0 %v1118
        %v1191 = vpop.f32.mrf.mxu0
        %v1192 = vadd.f32 %v1076, %v1191
        %1193 = vmatmul.f32.gmra.mxu0 %v1121
        %v1194 = vpop.f32.mrf.mxu0
        %v1195 = vadd.f32 %v1076, %v1194
        %1196 = vmatmul.f32.gmra.mxu0 %v1124
        %v1197 = vpop.f32.mrf.mxu0
        %v1198 = vadd.f32 %v1076, %v1197
        %1199 = vmatmul.f32.gmra.mxu0 %v1127
        %v1200 = vpop.f32.mrf.mxu0
        %v1201 = vadd.f32 %v1076, %v1200
        %1202 = vmatmul.f32.gmra.mxu0 %v1130
        %v1203 = vpop.f32.mrf.mxu0
        %v1204 = vadd.f32 %v1076, %v1203
        %1205 = vmatmul.f32.gmra.mxu0 %v1133
        %v1206 = vpop.f32.mrf.mxu0
        %v1207 = vadd.f32 %v1076, %v1206
        %1208 = vdwg.mxu0
        %vm1209 = vcmask 785408
        %v1210 = vsel %vm1209, %v1153, -inf
        %1211 = vmax.xlane.f32.xlu0 %v1210
        %v1212 = vpop.xlane.xlu0 %1211
        %v1213 = vsel %vm1209, %v1156, -inf
        %1214 = vmax.xlane.f32.xlu0 %v1213
        %v1215 = vpop.xlane.xlu0 %1214
        %v1216 = vsel %vm1209, %v1159, -inf
        %1217 = vmax.xlane.f32.xlu0 %v1216
        %v1218 = vpop.xlane.xlu0 %1217
        %v1219 = vsel %vm1209, %v1162, -inf
        %1220 = vmax.xlane.f32.xlu0 %v1219
        %v1221 = vpop.xlane.xlu0 %1220
        %v1222 = vsel %vm1209, %v1165, -inf
        %1223 = vmax.xlane.f32.xlu0 %v1222
        %v1224 = vpop.xlane.xlu0 %1223
        %v1225 = vsel %vm1209, %v1168, -inf
        %1226 = vmax.xlane.f32.xlu0 %v1225
        %v1227 = vpop.xlane.xlu0 %1226
        %v1228 = vsel %vm1209, %v1171, -inf
        %1229 = vmax.xlane.f32.xlu0 %v1228
        %v1230 = vpop.xlane.xlu0 %1229
        %v1231 = vsel %vm1209, %v1174, -inf
        %1232 = vmax.xlane.f32.xlu0 %v1231
        %v1233 = vpop.xlane.xlu0 %1232
        %v1234 = vsel %vm1209, %v1177, -inf
        %1235 = vmax.xlane.f32.xlu0 %v1234
        %v1236 = vpop.xlane.xlu0 %1235
        %v1237 = vsel %vm1209, %v1180, -inf
        %1238 = vmax.xlane.f32.xlu0 %v1237
        %v1239 = vpop.xlane.xlu0 %1238
        %v1240 = vsel %vm1209, %v1183, -inf
        %1241 = vmax.xlane.f32.xlu0 %v1240
        %v1242 = vpop.xlane.xlu0 %1241
        %v1243 = vsel %vm1209, %v1186, -inf
        %1244 = vmax.xlane.f32.xlu0 %v1243
        %v1245 = vpop.xlane.xlu0 %1244
        %v1246 = vsel %vm1209, %v1189, -inf
        %1247 = vmax.xlane.f32.xlu0 %v1246
        %v1248 = vpop.xlane.xlu0 %1247
        %v1249 = vsel %vm1209, %v1192, -inf
        %1250 = vmax.xlane.f32.xlu0 %v1249
        %v1251 = vpop.xlane.xlu0 %1250
        %v1252 = vsel %vm1209, %v1195, -inf
        %1253 = vmax.xlane.f32.xlu0 %v1252
        %v1254 = vpop.xlane.xlu0 %1253
        %v1255 = vsel %vm1209, %v1198, -inf
        %1256 = vmax.xlane.f32.xlu0 %v1255
        %v1257 = vpop.xlane.xlu0 %1256
        %v1258 = vsel %vm1209, %v1201, -inf
        %1259 = vmax.xlane.f32.xlu0 %v1258
        %v1260 = vpop.xlane.xlu0 %1259
        %v1261 = vsel %vm1209, %v1204, -inf
        %1262 = vmax.xlane.f32.xlu0 %v1261
        %v1263 = vpop.xlane.xlu0 %1262
        %v1264 = vsel %vm1209, %v1207, -inf
        %1265 = vmax.xlane.f32.xlu0 %v1264
        %v1266 = vpop.xlane.xlu0 %1265
        %v1267 = vsub.f32 %v1153, %v1212
        %v1268 = vsub.f32 %v1156, %v1215
        %v1269 = vsub.f32 %v1159, %v1218
        %v1270 = vsub.f32 %v1162, %v1221
        %v1271 = vsub.f32 %v1165, %v1224
        %v1272 = vsub.f32 %v1168, %v1227
        %v1273 = vsub.f32 %v1171, %v1230
        %v1274 = vsub.f32 %v1174, %v1233
        %v1275 = vsub.f32 %v1177, %v1236
        %v1276 = vsub.f32 %v1180, %v1239
        %v1277 = vsub.f32 %v1183, %v1242
        %v1278 = vsub.f32 %v1186, %v1245
        %v1279 = vsub.f32 %v1189, %v1248
        %v1280 = vsub.f32 %v1192, %v1251
        %v1281 = vsub.f32 %v1195, %v1254
        %v1282 = vsub.f32 %v1198, %v1257
        %v1283 = vsub.f32 %v1201, %v1260
        %v1284 = vsub.f32 %v1204, %v1263
        %v1285 = vsub.f32 %v1207, %v1266
        %v1286 = vmul.f32 %v1267, 1.442695
        %v1287 = vpow.pop %v1286
        %v1288 = vmul.f32 %v1268, 1.442695
        %v1289 = vpow.pop %v1288
        %v1290 = vmul.f32 %v1269, 1.442695
        %v1291 = vpow.pop %v1290
        %v1292 = vmul.f32 %v1270, 1.442695
        %v1293 = vpow.pop %v1292
        %v1294 = vmul.f32 %v1271, 1.442695
        %v1295 = vpow.pop %v1294
        %v1296 = vmul.f32 %v1272, 1.442695
        %v1297 = vpow.pop %v1296
        %v1298 = vmul.f32 %v1273, 1.442695
        %v1299 = vpow.pop %v1298
        %v1300 = vmul.f32 %v1274, 1.442695
        %v1301 = vpow.pop %v1300
        %v1302 = vmul.f32 %v1275, 1.442695
        %v1303 = vpow.pop %v1302
        %v1304 = vmul.f32 %v1276, 1.442695
        %v1305 = vpow.pop %v1304
        %v1306 = vmul.f32 %v1277, 1.442695
        %v1307 = vpow.pop %v1306
        %v1308 = vmul.f32 %v1278, 1.442695
        %v1309 = vpow.pop %v1308
        %v1310 = vmul.f32 %v1279, 1.442695
        %v1311 = vpow.pop %v1310
        %v1312 = vmul.f32 %v1280, 1.442695
        %v1313 = vpow.pop %v1312
        %v1314 = vmul.f32 %v1281, 1.442695
        %v1315 = vpow.pop %v1314
        %v1316 = vmul.f32 %v1282, 1.442695
        %v1317 = vpow.pop %v1316
        %v1318 = vmul.f32 %v1283, 1.442695
        %v1319 = vpow.pop %v1318
        %v1320 = vmul.f32 %v1284, 1.442695
        %v1321 = vpow.pop %v1320
        %v1322 = vmul.f32 %v1285, 1.442695
        %v1323 = vpow.pop %v1322
        %v1324 = vsel %vm1209, %v1287, 0.0
        %1325 = vadd.xlane.f32.xlu0 %v1324
        %v1326 = vpop.xlane.xlu0 %1325
        %v1327 = vsel %vm1209, %v1289, 0.0
        %1328 = vadd.xlane.f32.xlu0 %v1327
        %v1329 = vpop.xlane.xlu0 %1328
        %v1330 = vsel %vm1209, %v1291, 0.0
        %1331 = vadd.xlane.f32.xlu0 %v1330
        %v1332 = vpop.xlane.xlu0 %1331
        %v1333 = vsel %vm1209, %v1293, 0.0
        %1334 = vadd.xlane.f32.xlu0 %v1333
        %v1335 = vpop.xlane.xlu0 %1334
        %v1336 = vsel %vm1209, %v1295, 0.0
        %1337 = vadd.xlane.f32.xlu0 %v1336
        %v1338 = vpop.xlane.xlu0 %1337
        %v1339 = vsel %vm1209, %v1297, 0.0
        %1340 = vadd.xlane.f32.xlu0 %v1339
        %v1341 = vpop.xlane.xlu0 %1340
        %v1342 = vsel %vm1209, %v1299, 0.0
        %1343 = vadd.xlane.f32.xlu0 %v1342
        %v1344 = vpop.xlane.xlu0 %1343
        %v1345 = vsel %vm1209, %v1301, 0.0
        %1346 = vadd.xlane.f32.xlu0 %v1345
        %v1347 = vpop.xlane.xlu0 %1346
        %v1348 = vsel %vm1209, %v1303, 0.0
        %1349 = vadd.xlane.f32.xlu0 %v1348
        %v1350 = vpop.xlane.xlu0 %1349
        %v1351 = vsel %vm1209, %v1305, 0.0
        %1352 = vadd.xlane.f32.xlu0 %v1351
        %v1353 = vpop.xlane.xlu0 %1352
        %v1354 = vsel %vm1209, %v1307, 0.0
        %1355 = vadd.xlane.f32.xlu0 %v1354
        %v1356 = vpop.xlane.xlu0 %1355
        %v1357 = vsel %vm1209, %v1309, 0.0
        %1358 = vadd.xlane.f32.xlu0 %v1357
        %v1359 = vpop.xlane.xlu0 %1358
        %v1360 = vsel %vm1209, %v1311, 0.0
        %1361 = vadd.xlane.f32.xlu0 %v1360
        %v1362 = vpop.xlane.xlu0 %1361
        %v1363 = vsel %vm1209, %v1313, 0.0
        %1364 = vadd.xlane.f32.xlu0 %v1363
        %v1365 = vpop.xlane.xlu0 %1364
        %v1366 = vsel %vm1209, %v1315, 0.0
        %1367 = vadd.xlane.f32.xlu0 %v1366
        %v1368 = vpop.xlane.xlu0 %1367
        %v1369 = vsel %vm1209, %v1317, 0.0
        %1370 = vadd.xlane.f32.xlu0 %v1369
        %v1371 = vpop.xlane.xlu0 %1370
        %v1372 = vsel %vm1209, %v1319, 0.0
        %1373 = vadd.xlane.f32.xlu0 %v1372
        %v1374 = vpop.xlane.xlu0 %1373
        %v1375 = vsel %vm1209, %v1321, 0.0
        %1376 = vadd.xlane.f32.xlu0 %v1375
        %v1377 = vpop.xlane.xlu0 %1376
        %v1378 = vsel %vm1209, %v1323, 0.0
        %1379 = vadd.xlane.f32.xlu0 %v1378
        %v1380 = vpop.xlane.xlu0 %1379
        %v1381 = vrcp.pop %v1326
        %v1382 = vmul.f32 %v1326, %v1381
        %v1383 = vsub.f32 1.0, %v1382
        %v1384 = vmul.f32 %v1381, %v1383
        %v1385 = vadd.f32 %v1381, %v1384
        %vm1386 = vweird.f32 %v1326
        %vm1387 = vweird.f32 %v1381
        %vm1388 = vmor %vm1386, %vm1387
        %v1389 = vsel %vm1388, %v1381, %v1385
        %v1390 = vand.u32 2147483647, %v1326
        %vm1391 = vcmp.eq.f32.partialorder %v1390, 8.507059e+37
        %v1392 = vand.u32 %v1326, 2147483648
        %v1393 = vor.u32 1.1754944e-38, %v1392
        %v1394 = vsel %vm1391, %v1393, %v1389
        %v1395 = vmul.f32 %v1287, %v1394
        %v1396 = vrcp.pop %v1329
        %v1397 = vmul.f32 %v1329, %v1396
        %v1398 = vsub.f32 1.0, %v1397
        %v1399 = vmul.f32 %v1396, %v1398
        %v1400 = vadd.f32 %v1396, %v1399
        %vm1401 = vweird.f32 %v1329
        %vm1402 = vweird.f32 %v1396
        %vm1403 = vmor %vm1401, %vm1402
        %v1404 = vsel %vm1403, %v1396, %v1400
        %v1405 = vand.u32 2147483647, %v1329
        %vm1406 = vcmp.eq.f32.partialorder %v1405, 8.507059e+37
        %v1407 = vand.u32 %v1329, 2147483648
        %v1408 = vor.u32 1.1754944e-38, %v1407
        %v1409 = vsel %vm1406, %v1408, %v1404
        %v1410 = vmul.f32 %v1289, %v1409
        %v1411 = vrcp.pop %v1332
        %v1412 = vmul.f32 %v1332, %v1411
        %v1413 = vsub.f32 1.0, %v1412
        %v1414 = vmul.f32 %v1411, %v1413
        %v1415 = vadd.f32 %v1411, %v1414
        %vm1416 = vweird.f32 %v1332
        %vm1417 = vweird.f32 %v1411
        %vm1418 = vmor %vm1416, %vm1417
        %v1419 = vsel %vm1418, %v1411, %v1415
        %v1420 = vand.u32 2147483647, %v1332
        %vm1421 = vcmp.eq.f32.partialorder %v1420, 8.507059e+37
        %v1422 = vand.u32 %v1332, 2147483648
        %v1423 = vor.u32 1.1754944e-38, %v1422
        %v1424 = vsel %vm1421, %v1423, %v1419
        %v1425 = vmul.f32 %v1291, %v1424
        %v1426 = vrcp.pop %v1335
        %v1427 = vmul.f32 %v1335, %v1426
        %v1428 = vsub.f32 1.0, %v1427
        %v1429 = vmul.f32 %v1426, %v1428
        %v1430 = vadd.f32 %v1426, %v1429
        %vm1431 = vweird.f32 %v1335
        %vm1432 = vweird.f32 %v1426
        %vm1433 = vmor %vm1431, %vm1432
        %v1434 = vsel %vm1433, %v1426, %v1430
        %v1435 = vand.u32 2147483647, %v1335
        %vm1436 = vcmp.eq.f32.partialorder %v1435, 8.507059e+37
        %v1437 = vand.u32 %v1335, 2147483648
        %v1438 = vor.u32 1.1754944e-38, %v1437
        %v1439 = vsel %vm1436, %v1438, %v1434
        %v1440 = vmul.f32 %v1293, %v1439
        %v1441 = vrcp.pop %v1338
        %v1442 = vmul.f32 %v1338, %v1441
        %v1443 = vsub.f32 1.0, %v1442
        %v1444 = vmul.f32 %v1441, %v1443
        %v1445 = vadd.f32 %v1441, %v1444
        %vm1446 = vweird.f32 %v1338
        %vm1447 = vweird.f32 %v1441
        %vm1448 = vmor %vm1446, %vm1447
        %v1449 = vsel %vm1448, %v1441, %v1445
        %v1450 = vand.u32 2147483647, %v1338
        %vm1451 = vcmp.eq.f32.partialorder %v1450, 8.507059e+37
        %v1452 = vand.u32 %v1338, 2147483648
        %v1453 = vor.u32 1.1754944e-38, %v1452
        %v1454 = vsel %vm1451, %v1453, %v1449
        %v1455 = vmul.f32 %v1295, %v1454
        %v1456 = vrcp.pop %v1341
        %v1457 = vmul.f32 %v1341, %v1456
        %v1458 = vsub.f32 1.0, %v1457
        %v1459 = vmul.f32 %v1456, %v1458
        %v1460 = vadd.f32 %v1456, %v1459
        %vm1461 = vweird.f32 %v1341
        %vm1462 = vweird.f32 %v1456
        %vm1463 = vmor %vm1461, %vm1462
        %v1464 = vsel %vm1463, %v1456, %v1460
        %v1465 = vand.u32 2147483647, %v1341
        %vm1466 = vcmp.eq.f32.partialorder %v1465, 8.507059e+37
        %v1467 = vand.u32 %v1341, 2147483648
        %v1468 = vor.u32 1.1754944e-38, %v1467
        %v1469 = vsel %vm1466, %v1468, %v1464
        %v1470 = vmul.f32 %v1297, %v1469
        %v1471 = vrcp.pop %v1344
        %v1472 = vmul.f32 %v1344, %v1471
        %v1473 = vsub.f32 1.0, %v1472
        %v1474 = vmul.f32 %v1471, %v1473
        %v1475 = vadd.f32 %v1471, %v1474
        %vm1476 = vweird.f32 %v1344
        %vm1477 = vweird.f32 %v1471
        %vm1478 = vmor %vm1476, %vm1477
        %v1479 = vsel %vm1478, %v1471, %v1475
        %v1480 = vand.u32 2147483647, %v1344
        %vm1481 = vcmp.eq.f32.partialorder %v1480, 8.507059e+37
        %v1482 = vand.u32 %v1344, 2147483648
        %v1483 = vor.u32 1.1754944e-38, %v1482
        %v1484 = vsel %vm1481, %v1483, %v1479
        %v1485 = vmul.f32 %v1299, %v1484
        %v1486 = vrcp.pop %v1347
        %v1487 = vmul.f32 %v1347, %v1486
        %v1488 = vsub.f32 1.0, %v1487
        %v1489 = vmul.f32 %v1486, %v1488
        %v1490 = vadd.f32 %v1486, %v1489
        %vm1491 = vweird.f32 %v1347
        %vm1492 = vweird.f32 %v1486
        %vm1493 = vmor %vm1491, %vm1492
        %v1494 = vsel %vm1493, %v1486, %v1490
        %v1495 = vand.u32 2147483647, %v1347
        %vm1496 = vcmp.eq.f32.partialorder %v1495, 8.507059e+37
        %v1497 = vand.u32 %v1347, 2147483648
        %v1498 = vor.u32 1.1754944e-38, %v1497
        %v1499 = vsel %vm1496, %v1498, %v1494
        %v1500 = vmul.f32 %v1301, %v1499
        %v1501 = vrcp.pop %v1350
        %v1502 = vmul.f32 %v1350, %v1501
        %v1503 = vsub.f32 1.0, %v1502
        %v1504 = vmul.f32 %v1501, %v1503
        %v1505 = vadd.f32 %v1501, %v1504
        %vm1506 = vweird.f32 %v1350
        %vm1507 = vweird.f32 %v1501
        %vm1508 = vmor %vm1506, %vm1507
        %v1509 = vsel %vm1508, %v1501, %v1505
        %v1510 = vand.u32 2147483647, %v1350
        %vm1511 = vcmp.eq.f32.partialorder %v1510, 8.507059e+37
        %v1512 = vand.u32 %v1350, 2147483648
        %v1513 = vor.u32 1.1754944e-38, %v1512
        %v1514 = vsel %vm1511, %v1513, %v1509
        %v1515 = vmul.f32 %v1303, %v1514
        %v1516 = vrcp.pop %v1353
        %v1517 = vmul.f32 %v1353, %v1516
        %v1518 = vsub.f32 1.0, %v1517
        %v1519 = vmul.f32 %v1516, %v1518
        %v1520 = vadd.f32 %v1516, %v1519
        %vm1521 = vweird.f32 %v1353
        %vm1522 = vweird.f32 %v1516
        %vm1523 = vmor %vm1521, %vm1522
        %v1524 = vsel %vm1523, %v1516, %v1520
        %v1525 = vand.u32 2147483647, %v1353
        %vm1526 = vcmp.eq.f32.partialorder %v1525, 8.507059e+37
        %v1527 = vand.u32 %v1353, 2147483648
        %v1528 = vor.u32 1.1754944e-38, %v1527
        %v1529 = vsel %vm1526, %v1528, %v1524
        %v1530 = vmul.f32 %v1305, %v1529
        %v1531 = vrcp.pop %v1356
        %v1532 = vmul.f32 %v1356, %v1531
        %v1533 = vsub.f32 1.0, %v1532
        %v1534 = vmul.f32 %v1531, %v1533
        %v1535 = vadd.f32 %v1531, %v1534
        %vm1536 = vweird.f32 %v1356
        %vm1537 = vweird.f32 %v1531
        %vm1538 = vmor %vm1536, %vm1537
        %v1539 = vsel %vm1538, %v1531, %v1535
        %v1540 = vand.u32 2147483647, %v1356
        %vm1541 = vcmp.eq.f32.partialorder %v1540, 8.507059e+37
        %v1542 = vand.u32 %v1356, 2147483648
        %v1543 = vor.u32 1.1754944e-38, %v1542
        %v1544 = vsel %vm1541, %v1543, %v1539
        %v1545 = vmul.f32 %v1307, %v1544
        %v1546 = vrcp.pop %v1359
        %v1547 = vmul.f32 %v1359, %v1546
        %v1548 = vsub.f32 1.0, %v1547
        %v1549 = vmul.f32 %v1546, %v1548
        %v1550 = vadd.f32 %v1546, %v1549
        %vm1551 = vweird.f32 %v1359
        %vm1552 = vweird.f32 %v1546
        %vm1553 = vmor %vm1551, %vm1552
        %v1554 = vsel %vm1553, %v1546, %v1550
        %v1555 = vand.u32 2147483647, %v1359
        %vm1556 = vcmp.eq.f32.partialorder %v1555, 8.507059e+37
        %v1557 = vand.u32 %v1359, 2147483648
        %v1558 = vor.u32 1.1754944e-38, %v1557
        %v1559 = vsel %vm1556, %v1558, %v1554
        %v1560 = vmul.f32 %v1309, %v1559
        %v1561 = vrcp.pop %v1362
        %v1562 = vmul.f32 %v1362, %v1561
        %v1563 = vsub.f32 1.0, %v1562
        %v1564 = vmul.f32 %v1561, %v1563
        %v1565 = vadd.f32 %v1561, %v1564
        %vm1566 = vweird.f32 %v1362
        %vm1567 = vweird.f32 %v1561
        %vm1568 = vmor %vm1566, %vm1567
        %v1569 = vsel %vm1568, %v1561, %v1565
        %v1570 = vand.u32 2147483647, %v1362
        %vm1571 = vcmp.eq.f32.partialorder %v1570, 8.507059e+37
        %v1572 = vand.u32 %v1362, 2147483648
        %v1573 = vor.u32 1.1754944e-38, %v1572
        %v1574 = vsel %vm1571, %v1573, %v1569
        %v1575 = vmul.f32 %v1311, %v1574
        %v1576 = vrcp.pop %v1365
        %v1577 = vmul.f32 %v1365, %v1576
        %v1578 = vsub.f32 1.0, %v1577
        %v1579 = vmul.f32 %v1576, %v1578
        %v1580 = vadd.f32 %v1576, %v1579
        %vm1581 = vweird.f32 %v1365
        %vm1582 = vweird.f32 %v1576
        %vm1583 = vmor %vm1581, %vm1582
        %v1584 = vsel %vm1583, %v1576, %v1580
        %v1585 = vand.u32 2147483647, %v1365
        %vm1586 = vcmp.eq.f32.partialorder %v1585, 8.507059e+37
        %v1587 = vand.u32 %v1365, 2147483648
        %v1588 = vor.u32 1.1754944e-38, %v1587
        %v1589 = vsel %vm1586, %v1588, %v1584
        %v1590 = vmul.f32 %v1313, %v1589
        %v1591 = vrcp.pop %v1368
        %v1592 = vmul.f32 %v1368, %v1591
        %v1593 = vsub.f32 1.0, %v1592
        %v1594 = vmul.f32 %v1591, %v1593
        %v1595 = vadd.f32 %v1591, %v1594
        %vm1596 = vweird.f32 %v1368
        %vm1597 = vweird.f32 %v1591
        %vm1598 = vmor %vm1596, %vm1597
        %v1599 = vsel %vm1598, %v1591, %v1595
        %v1600 = vand.u32 2147483647, %v1368
        %vm1601 = vcmp.eq.f32.partialorder %v1600, 8.507059e+37
        %v1602 = vand.u32 %v1368, 2147483648
        %v1603 = vor.u32 1.1754944e-38, %v1602
        %v1604 = vsel %vm1601, %v1603, %v1599
        %v1605 = vmul.f32 %v1315, %v1604
        %v1606 = vrcp.pop %v1371
        %v1607 = vmul.f32 %v1371, %v1606
        %v1608 = vsub.f32 1.0, %v1607
        %v1609 = vmul.f32 %v1606, %v1608
        %v1610 = vadd.f32 %v1606, %v1609
        %vm1611 = vweird.f32 %v1371
        %vm1612 = vweird.f32 %v1606
        %vm1613 = vmor %vm1611, %vm1612
        %v1614 = vsel %vm1613, %v1606, %v1610
        %v1615 = vand.u32 2147483647, %v1371
        %vm1616 = vcmp.eq.f32.partialorder %v1615, 8.507059e+37
        %v1617 = vand.u32 %v1371, 2147483648
        %v1618 = vor.u32 1.1754944e-38, %v1617
        %v1619 = vsel %vm1616, %v1618, %v1614
        %v1620 = vmul.f32 %v1317, %v1619
        %v1621 = vrcp.pop %v1374
        %v1622 = vmul.f32 %v1374, %v1621
        %v1623 = vsub.f32 1.0, %v1622
        %v1624 = vmul.f32 %v1621, %v1623
        %v1625 = vadd.f32 %v1621, %v1624
        %vm1626 = vweird.f32 %v1374
        %vm1627 = vweird.f32 %v1621
        %vm1628 = vmor %vm1626, %vm1627
        %v1629 = vsel %vm1628, %v1621, %v1625
        %v1630 = vand.u32 2147483647, %v1374
        %vm1631 = vcmp.eq.f32.partialorder %v1630, 8.507059e+37
        %v1632 = vand.u32 %v1374, 2147483648
        %v1633 = vor.u32 1.1754944e-38, %v1632
        %v1634 = vsel %vm1631, %v1633, %v1629
        %v1635 = vmul.f32 %v1319, %v1634
        %v1636 = vrcp.pop %v1377
        %v1637 = vmul.f32 %v1377, %v1636
        %v1638 = vsub.f32 1.0, %v1637
        %v1639 = vmul.f32 %v1636, %v1638
        %v1640 = vadd.f32 %v1636, %v1639
        %vm1641 = vweird.f32 %v1377
        %vm1642 = vweird.f32 %v1636
        %vm1643 = vmor %vm1641, %vm1642
        %v1644 = vsel %vm1643, %v1636, %v1640
        %v1645 = vand.u32 2147483647, %v1377
        %vm1646 = vcmp.eq.f32.partialorder %v1645, 8.507059e+37
        %v1647 = vand.u32 %v1377, 2147483648
        %v1648 = vor.u32 1.1754944e-38, %v1647
        %v1649 = vsel %vm1646, %v1648, %v1644
        %v1650 = vmul.f32 %v1321, %v1649
        %v1651 = vrcp.pop %v1380
        %v1652 = vmul.f32 %v1380, %v1651
        %v1653 = vsub.f32 1.0, %v1652
        %v1654 = vmul.f32 %v1651, %v1653
        %v1655 = vadd.f32 %v1651, %v1654
        %vm1656 = vweird.f32 %v1380
        %vm1657 = vweird.f32 %v1651
        %vm1658 = vmor %vm1656, %vm1657
        %v1659 = vsel %vm1658, %v1651, %v1655
        %v1660 = vand.u32 2147483647, %v1380
        %vm1661 = vcmp.eq.f32.partialorder %v1660, 8.507059e+37
        %v1662 = vand.u32 %v1380, 2147483648
        %v1663 = vor.u32 1.1754944e-38, %v1662
        %v1664 = vsel %vm1661, %v1663, %v1659
        %v1665 = vmul.f32 %v1323, %v1664
        %v1666 = vadd.f32 %v373, %v392
        %v1667 = vadd.f32 %v374, %v393
        %v1668 = vadd.f32 %v375, %v394
        %v1669 = vadd.f32 %v376, %v395
        %v1670 = vadd.f32 %v377, %v396
        %v1671 = vadd.f32 %v378, %v397
        %v1672 = vadd.f32 %v379, %v398
        %v1673 = vadd.f32 %v380, %v399
        %v1674 = vadd.f32 %v381, %v400
        %v1675 = vadd.f32 %v382, %v401
        %v1676 = vadd.f32 %v383, %v402
        %v1677 = vadd.f32 %v384, %v403
        %v1678 = vadd.f32 %v385, %v404
        %v1679 = vadd.f32 %v386, %v405
        %v1680 = vadd.f32 %v387, %v406
        %v1681 = vadd.f32 %v388, %v407
        %v1682 = vadd.f32 %v389, %v408
        %v1683 = vadd.f32 %v390, %v409
        %v1684 = vadd.f32 %v391, %v410
        %v1685 = vmul.f32 %v1666, 0.25
        %v1686 = vmul.f32 %v1667, 0.25
        %v1687 = vmul.f32 %v1668, 0.25
        %v1688 = vmul.f32 %v1669, 0.25
        %v1689 = vmul.f32 %v1670, 0.25
        %v1690 = vmul.f32 %v1671, 0.25
        %v1691 = vmul.f32 %v1672, 0.25
        %v1692 = vmul.f32 %v1673, 0.25
        %v1693 = vmul.f32 %v1674, 0.25
        %v1694 = vmul.f32 %v1675, 0.25
        %v1695 = vmul.f32 %v1676, 0.25
        %v1696 = vmul.f32 %v1677, 0.25
        %v1697 = vmul.f32 %v1678, 0.25
        %v1698 = vmul.f32 %v1679, 0.25
        %v1699 = vmul.f32 %v1680, 0.25
        %v1700 = vmul.f32 %v1681, 0.25
        %v1701 = vmul.f32 %v1682, 0.25
        %v1702 = vmul.f32 %v1683, 0.25
        %v1703 = vmul.f32 %v1684, 0.25
        %v1704 = vmul.f32 %v430, 0.5
        %v1705 = vmul.f32 %v431, 0.5
        %v1706 = vmul.f32 %v432, 0.5
        %v1707 = vmul.f32 %v433, 0.5
        %v1708 = vmul.f32 %v434, 0.5
        %v1709 = vmul.f32 %v435, 0.5
        %v1710 = vmul.f32 %v436, 0.5
        %v1711 = vmul.f32 %v437, 0.5
        %v1712 = vmul.f32 %v438, 0.5
        %v1713 = vmul.f32 %v439, 0.5
        %v1714 = vmul.f32 %v440, 0.5
        %v1715 = vmul.f32 %v441, 0.5
        %v1716 = vmul.f32 %v442, 0.5
        %v1717 = vmul.f32 %v443, 0.5
        %v1718 = vmul.f32 %v444, 0.5
        %v1719 = vmul.f32 %v445, 0.5
        %v1720 = vmul.f32 %v446, 0.5
        %v1721 = vmul.f32 %v447, 0.5
        %v1722 = vmul.f32 %v448, 0.5
        %v1723 = vadd.f32 %v1685, %v1704
        %v1724 = vadd.f32 %v1686, %v1705
        %v1725 = vadd.f32 %v1687, %v1706
        %v1726 = vadd.f32 %v1688, %v1707
        %v1727 = vadd.f32 %v1689, %v1708
        %v1728 = vadd.f32 %v1690, %v1709
        %v1729 = vadd.f32 %v1691, %v1710
        %v1730 = vadd.f32 %v1692, %v1711
        %v1731 = vadd.f32 %v1693, %v1712
        %v1732 = vadd.f32 %v1694, %v1713
        %v1733 = vadd.f32 %v1695, %v1714
        %v1734 = vadd.f32 %v1696, %v1715
        %v1735 = vadd.f32 %v1697, %v1716
        %v1736 = vadd.f32 %v1698, %v1717
        %v1737 = vadd.f32 %v1699, %v1718
        %v1738 = vadd.f32 %v1700, %v1719
        %v1739 = vadd.f32 %v1701, %v1720
        %v1740 = vadd.f32 %v1702, %v1721
        %v1741 = vadd.f32 %v1703, %v1722
        %1761 = vrot.lane.b32.xlu0 %v1395, 32
        %v1762 = vpop.permute.xlu0 %1761
        %1763 = vrot.lane.b32.xlu0 %v1410, 32
        %v1764 = vpop.permute.xlu0 %1763
        %1765 = vrot.lane.b32.xlu0 %v1425, 32
        %v1766 = vpop.permute.xlu0 %1765
        %1767 = vrot.lane.b32.xlu0 %v1440, 32
        %v1768 = vpop.permute.xlu0 %1767
        %1769 = vrot.lane.b32.xlu0 %v1455, 32
        %v1770 = vpop.permute.xlu0 %1769
        %1771 = vrot.lane.b32.xlu0 %v1470, 32
        %v1772 = vpop.permute.xlu0 %1771
        %1773 = vrot.lane.b32.xlu0 %v1485, 32
        %v1774 = vpop.permute.xlu0 %1773
        %1775 = vrot.lane.b32.xlu0 %v1500, 32
        %v1776 = vpop.permute.xlu0 %1775
        %1777 = vrot.lane.b32.xlu0 %v1515, 32
        %v1778 = vpop.permute.xlu0 %1777
        %1779 = vrot.lane.b32.xlu0 %v1530, 32
        %v1780 = vpop.permute.xlu0 %1779
        %1781 = vrot.lane.b32.xlu0 %v1545, 32
        %v1782 = vpop.permute.xlu0 %1781
        %1783 = vrot.lane.b32.xlu0 %v1560, 32
        %v1784 = vpop.permute.xlu0 %1783
        %1785 = vrot.lane.b32.xlu0 %v1575, 32
        %v1786 = vpop.permute.xlu0 %1785
        %1787 = vrot.lane.b32.xlu0 %v1590, 32
        %v1788 = vpop.permute.xlu0 %1787
        %1789 = vrot.lane.b32.xlu0 %v1605, 32
        %v1790 = vpop.permute.xlu0 %1789
        %1791 = vrot.lane.b32.xlu0 %v1620, 32
        %v1792 = vpop.permute.xlu0 %1791
        %1793 = vrot.lane.b32.xlu0 %v1635, 32
        %v1794 = vpop.permute.xlu0 %1793
        %1795 = vrot.lane.b32.xlu0 %v1650, 32
        %v1796 = vpop.permute.xlu0 %1795
        %1797 = vrot.lane.b32.xlu0 %v1665, 32
        %v1798 = vpop.permute.xlu0 %1797
        %v1818 = vsel %vm465, %v1723, %v1762
        %v1819 = vsel %vm465, %v1724, %v1764
        %v1820 = vsel %vm465, %v1725, %v1766
        %v1821 = vsel %vm465, %v1726, %v1768
        %v1822 = vsel %vm465, %v1727, %v1770
        %v1823 = vsel %vm465, %v1728, %v1772
        %v1824 = vsel %vm465, %v1729, %v1774
        %v1825 = vsel %vm465, %v1730, %v1776
        %v1826 = vsel %vm465, %v1731, %v1778
        %v1827 = vsel %vm465, %v1732, %v1780
        %v1828 = vsel %vm465, %v1733, %v1782
        %v1829 = vsel %vm465, %v1734, %v1784
        %v1830 = vsel %vm465, %v1735, %v1786
        %v1831 = vsel %vm465, %v1736, %v1788
        %v1832 = vsel %vm465, %v1737, %v1790
        %v1833 = vsel %vm465, %v1738, %v1792
        %v1834 = vsel %vm465, %v1739, %v1794
        %v1835 = vsel %vm465, %v1740, %v1796
        %v1836 = vsel %vm465, %v1741, %v1798
        %1837 = vst [vmem:[%s347] sm:$0xff] %v1818
        %1838 = vst [vmem:[%s347 + $0x8] sm:$0xff] %v1819
        %1839 = vst [vmem:[%s347 + $0x10] sm:$0xff] %v1820
        %1840 = vst [vmem:[%s347 + $0x18] sm:$0xff] %v1821
        %1841 = vst [vmem:[%s347 + $0x20] sm:$0xff] %v1822
        %1842 = vst [vmem:[%s347 + $0x28] sm:$0xff] %v1823
        %1843 = vst [vmem:[%s347 + $0x30] sm:$0xff] %v1824
        %1844 = vst [vmem:[%s347 + $0x38] sm:$0xff] %v1825
        %1845 = vst [vmem:[%s347 + $0x40] sm:$0xff] %v1826
        %1846 = vst [vmem:[%s347 + $0x48] sm:$0xff] %v1827
        %1847 = vst [vmem:[%s347 + $0x50] sm:$0xff] %v1828
        %1848 = vst [vmem:[%s347 + $0x58] sm:$0xff] %v1829
        %1849 = vst [vmem:[%s347 + $0x60] sm:$0xff] %v1830
        %1850 = vst [vmem:[%s347 + $0x68] sm:$0xff] %v1831
        %1851 = vst [vmem:[%s347 + $0x70] sm:$0xff] %v1832
        %1852 = vst [vmem:[%s347 + $0x78] sm:$0xff] %v1833
        %1853 = vst [vmem:[%s347 + $0x80] sm:$0xff] %v1834
        %1854 = vst [vmem:[%s347 + $0x88] sm:$0xff] %v1835
        %1855 = vst [vmem:[%s347 + $0x90] sm:$0xff] %v1836
        %s1856 = sand.u32 %s218, 1
        %s1857 = scalar_lea.sflag [#allocation3], %s1856
        %s1858 = sand.u32 %s218, 1
        %s1859 = smul.addr %s1858, 152
        %s1860 = scalar_lea.vmem [#allocation2], %s1859
        // Predicated region
        $region53: #{tpu_custom_call.1} parent=51 // pred_check
          %p1861 = pneg %p228
        $region54: #{tpu_custom_call.1} parent=51 // pred_check_branch
          %1863 = sbr.rel (%p1861) target = $region56
        $region55: #{tpu_custom_call.1} parent=51 // pred_region
          %s1864 = smul.u32 19, %s22
          %1866 = vsyncadd %s1857, 0
          %s1867 = smul.addr %s1864, 8
          %s1868 = scalar_lea.hbm %s8, %s1867
          %s1869 = sshll.u32 %s1860, 4
          %s1870 = int_to_ptr.vmem [resolvable:$true] %s1869
          %s1871 = sshll.u32 %s1868, 4
          %s1872 = int_to_ptr.hbm [resolvable:$true] %s1871
          %1877 = dma.vmem_to_hbm [thread:$0]  %s1870, 2432, %s1872, %s1857, 128, 128, 8
        $region56: #{tpu_custom_call.1} parent=51 // pred_fallthru
          _
      $region52: #{tpu_custom_call.1} parent=5 // pred_fallthru
        _
      %p1878 = scmp.le.s32.totalorder 2, %s17
      // Predicated region
      $region57: #{tpu_custom_call.1} parent=5 // pred_check
        %p1879 = pneg %p1878
      $region58: #{tpu_custom_call.1} parent=5 // pred_check_branch
        %1881 = sbr.rel (%p1879) target = $region60
      $region59: #{tpu_custom_call.1} parent=5 // pred_region
        %s1882 = ssub.s32 %s17, 2
        // Predicated region
        $region61: #{tpu_custom_call.1} parent=59 // pred_check
          %p1883 = pneg %p234
        $region62: #{tpu_custom_call.1} parent=59 // pred_check_branch
          %1885 = sbr.rel (%p1883) target = $region64
        $region63: #{tpu_custom_call.1} parent=59 // pred_region
          %s1886 = sand.u32 %s219, 1
          %s1887 = scalar_lea.sflag [#allocation3], %s1886
          %s1888 = sand.u32 %s219, 1
          %s1889 = smul.addr %s1888, 152
          %s1890 = scalar_lea.vmem [#allocation2], %s1889
          %1892 = dma.done %s1887, 2432
        $region64: #{tpu_custom_call.1} parent=59 // pred_fallthru
          _
      $region60: #{tpu_custom_call.1} parent=5 // pred_fallthru
        _
    $region6: #{tpu_custom_call.1} parent=1 // loop_footer
      %s21 = sadd.s32 1, %s17
    $region7: #{tpu_custom_call.1} parent=1 // loop_footer_branch
      %16 = sbr.rel target = $region3
    $region8: #{tpu_custom_call.1} parent=1 // loop_exit
      _
    %1893 = vsyncpa [#allocation3], 1
    %s1894 = scalar_lea.sflag [#allocation3], 1
    %1895 = vsyncpa %s1894, 1

</llo_original>
